<compile_context>
chip_gen: v7x
topology: tpu7x:2x2x1
jax: 0.10.0
libtpu: 0.0.40
codegen_flags: <defaults>
</compile_context>

<pallas_src>
import functools
import math

import jax
import jax.numpy as jnp
from jax.experimental import pallas as pl
from jax.experimental.pallas import tpu as pltpu


def _pick_tile(n, cap):
    """Largest tile <= cap that divides n and is a multiple of 8 (else full n)."""
    if n <= cap:
        return n
    for t in range(cap, 0, -1):
        if n % t == 0 and t % 8 == 0:
            return t
    return n


# --------------------------------------------------------------------------
# Kernel 1: depthwise 3x3 conv + bias + residual (local_conv(x) + x), NHWC.
# --------------------------------------------------------------------------
def _dwconv3_res_kernel(xp_ref, w_ref, b_ref, o_ref):
    # xp_ref: (1, H+2, W+2, C) zero-padded input; w_ref: (3, 3, C); b_ref: (1, 1, C)
    # o_ref : (1, H, W, C) = conv(x) + bias + x
    H = o_ref.shape[1]
    W = o_ref.shape[2]
    b = b_ref[0, 0, :].astype(jnp.float32)                      # hoisted bias
    center = xp_ref[0, 1:1 + H, 1:1 + W, :].astype(jnp.float32)  # residual term
    acc = center + b
    for dy in range(3):                                          # statically unrolled taps
        for dx in range(3):
            win = xp_ref[0, dy:dy + H, dx:dx + W, :].astype(jnp.float32)
            acc = acc + win * w_ref[dy, dx, :].astype(jnp.float32)
    o_ref[0] = acc.astype(o_ref.dtype)


def dwconv3x3_residual(x_nhwc, w, b):
    """y = depthwise_conv3x3(x) + bias + x, 'same' zero padding, NHWC layout."""
    N, H, W, C = x_nhwc.shape
    xp = jnp.pad(x_nhwc, ((0, 0), (1, 1), (1, 1), (0, 0)))
    return pl.pallas_call(
        _dwconv3_res_kernel,
        out_shape=jax.ShapeDtypeStruct((N, H, W, C), x_nhwc.dtype),
        grid=(N,),
        in_specs=[
            pl.BlockSpec((1, H + 2, W + 2, C), lambda n: (n, 0, 0, 0)),
            pl.BlockSpec((3, 3, C), lambda n: (0, 0, 0)),
            pl.BlockSpec((1, 1, C), lambda n: (0, 0, 0)),
        ],
        out_specs=pl.BlockSpec((1, H, W, C), lambda n: (n, 0, 0, 0)),
        compiler_params=pltpu.CompilerParams(dimension_semantics=("parallel",)),
    )(xp, w, b.reshape(1, 1, C))


# --------------------------------------------------------------------------
# Kernel 2: fused q / k / v projections (the 1x1 convs) as MXU matmuls.
# --------------------------------------------------------------------------
def _qkv_proj_kernel(x_ref, kv_ref, wq_ref, bq_ref, wk_ref, bk_ref, wv_ref, bv_ref,
                     q_ref, k_ref, v_ref):
    x = x_ref[...].astype(jnp.float32)     # (TM, C)  rows = pixels
    kv = kv_ref[...].astype(jnp.float32)   # (TM, C)
    q = jnp.dot(x, wq_ref[...].astype(jnp.float32), preferred_element_type=jnp.float32)
    k = jnp.dot(kv, wk_ref[...].astype(jnp.float32), preferred_element_type=jnp.float32)
    v = jnp.dot(kv, wv_ref[...].astype(jnp.float32), preferred_element_type=jnp.float32)
    q_ref[...] = (q + bq_ref[...].astype(jnp.float32)).astype(q_ref.dtype)
    k_ref[...] = (k + bk_ref[...].astype(jnp.float32)).astype(k_ref.dtype)
    v_ref[...] = (v + bv_ref[...].astype(jnp.float32)).astype(v_ref.dtype)


def qkv_projection(x_flat, kv_flat, wq, bq, wk, bk, wv, bv, *, tile_m=256):
    M, C = x_flat.shape
    Co = wq.shape[1]
    TM = _pick_tile(M, tile_m)
    row_spec = pl.BlockSpec((TM, C), lambda i: (i, 0))
    w_spec = pl.BlockSpec((C, Co), lambda i: (0, 0))
    b_spec = pl.BlockSpec((1, Co), lambda i: (0, 0))
    out_spec = pl.BlockSpec((TM, Co), lambda i: (i, 0))
    out_sds = jax.ShapeDtypeStruct((M, Co), x_flat.dtype)
    return pl.pallas_call(
        _qkv_proj_kernel,
        out_shape=(out_sds, out_sds, out_sds),
        grid=(M // TM,),
        in_specs=[row_spec, row_spec, w_spec, b_spec, w_spec, b_spec, w_spec, b_spec],
        out_specs=(out_spec, out_spec, out_spec),
        compiler_params=pltpu.CompilerParams(dimension_semantics=("parallel",)),
    )(x_flat, kv_flat, wq, bq.reshape(1, Co), wk, bk.reshape(1, Co), wv, bv.reshape(1, Co))


# --------------------------------------------------------------------------
# Kernel 3: flash-style attention (online softmax) over N = H*W tokens.
# --------------------------------------------------------------------------
def _flash_attn_kernel(q_ref, k_ref, v_ref, o_ref, m_sc, l_sc, acc_sc, *, scale):
    ki = pl.program_id(2)

    @pl.when(ki == 0)
    def _init():
        m_sc[...] = jnp.full(m_sc.shape, -jnp.inf, m_sc.dtype)
        l_sc[...] = jnp.zeros(l_sc.shape, l_sc.dtype)
        acc_sc[...] = jnp.zeros(acc_sc.shape, acc_sc.dtype)

    q = q_ref[0].astype(jnp.float32) * scale        # (TQ, D)
    k = k_ref[0].astype(jnp.float32)                # (TK, D)
    v = v_ref[0].astype(jnp.float32)                # (TK, D)

    # scores = q @ k^T  (MXU, f32 accumulate)
    s = jax.lax.dot_general(q, k, (((1,), (1,)), ((), ())),
                            preferred_element_type=jnp.float32)   # (TQ, TK)

    m_prev = m_sc[...]                                            # (TQ, 1)
    m_new = jnp.maximum(m_prev, jnp.max(s, axis=-1, keepdims=True))
    alpha = jnp.exp(m_prev - m_new)
    p = jnp.exp(s - m_new)
    l_sc[...] = alpha * l_sc[...] + jnp.sum(p, axis=-1, keepdims=True)
    acc_sc[...] = alpha * acc_sc[...] + jnp.dot(p, v, preferred_element_type=jnp.float32)
    m_sc[...] = m_new

    @pl.when(ki == pl.num_programs(2) - 1)
    def _finalize():
        inv_l = pl.reciprocal(l_sc[...], approx=False)
        o_ref[0] = (acc_sc[...] * inv_l).astype(o_ref.dtype)


def flash_attention(q, k, v, scale, *, tile_q=128, tile_k=128):
    """q, k, v: (G, N, D) with G = batch * heads. Returns softmax(q k^T * scale) v."""
    G, N, D = q.shape
    TQ = _pick_tile(N, tile_q)
    TK = _pick_tile(N, tile_k)
    kernel = functools.partial(_flash_attn_kernel, scale=float(scale))
    return pl.pallas_call(
        kernel,
        out_shape=jax.ShapeDtypeStruct((G, N, D), q.dtype),
        grid=(G, N // TQ, N // TK),
        in_specs=[
            pl.BlockSpec((1, TQ, D), lambda g, qi, ki: (g, qi, 0)),
            pl.BlockSpec((1, TK, D), lambda g, qi, ki: (g, ki, 0)),
            pl.BlockSpec((1, TK, D), lambda g, qi, ki: (g, ki, 0)),
        ],
        out_specs=pl.BlockSpec((1, TQ, D), lambda g, qi, ki: (g, qi, 0)),
        scratch_shapes=[
            pltpu.VMEM((TQ, 1), jnp.float32),   # running max
            pltpu.VMEM((TQ, 1), jnp.float32),   # running sum
            pltpu.VMEM((TQ, D), jnp.float32),   # output accumulator
        ],
        compiler_params=pltpu.CompilerParams(
            dimension_semantics=("parallel", "parallel", "arbitrary")),
    )(q, k, v)


# --------------------------------------------------------------------------
# Module wrapper.
# --------------------------------------------------------------------------
class AttentionPallas:
    """JAX/Pallas port of TransXNet Attention (sr_ratio == 1, inference)."""

    def __init__(self, dim, num_heads=1, qk_scale=None, attn_drop=0.0, sr_ratio=1, key=None):
        assert dim % num_heads == 0
        # TODO(synk): sr_ratio > 1 branch (ConvModule stack with BN2d + GELU spatial
        # reduction) is not ported; only the default Identity path is implemented.
        assert sr_ratio == 1, "only sr_ratio == 1 is supported"
        self.dim = dim
        self.num_heads = num_heads
        self.head_dim = dim // num_heads
        self.scale = qk_scale or self.head_dim ** (-0.5)
        self.attn_drop = attn_drop   # dropout == identity at p=0 / inference
        self.sr_ratio = sr_ratio

        if key is None:
            key = jax.random.PRNGKey(0)
        ks = jax.random.split(key, 8)
        C = dim
        bc = 1.0 / math.sqrt(C)      # 1x1 conv fan_in = C
        bl = 1.0 / math.sqrt(9.0)    # depthwise 3x3 fan_in = 9
        self.wq = jax.random.uniform(ks[0], (C, C), jnp.float32, -bc, bc)
        self.bq = jax.random.uniform(ks[1], (C,), jnp.float32, -bc, bc)
        self.wk = jax.random.uniform(ks[2], (C, C), jnp.float32, -bc, bc)
        self.bk = jax.random.uniform(ks[3], (C,), jnp.float32, -bc, bc)
        self.wv = jax.random.uniform(ks[4], (C, C), jnp.float32, -bc, bc)
        self.bv = jax.random.uniform(ks[5], (C,), jnp.float32, -bc, bc)
        self.w_local = jax.random.uniform(ks[6], (3, 3, C), jnp.float32, -bl, bl)
        self.b_local = jax.random.uniform(ks[7], (C,), jnp.float32, -bl, bl)

    def __call__(self, x_nchw, relative_pos_enc=None):
        # TODO(synk): relative_pos_enc (with bicubic resize) not implemented in-kernel.
        assert relative_pos_enc is None, "relative_pos_enc is not supported"
        B, C, H, W = x_nchw.shape
        N = H * W
        h, D = self.num_heads, self.head_dim

        x = jnp.transpose(x_nchw, (0, 2, 3, 1))                      # NHWC, once
        kv_feat = dwconv3x3_residual(x, self.w_local, self.b_local)  # local_conv(x) + x

        x_flat = x.reshape(B * N, C)
        kv_flat = kv_feat.reshape(B * N, C)
        q, k, v = qkv_projection(x_flat, kv_flat, self.wq, self.bq,
                                 self.wk, self.bk, self.wv, self.bv)

        def to_heads(t):
            return t.reshape(B, N, h, D).transpose(0, 2, 1, 3).reshape(B * h, N, D)

        o = flash_attention(to_heads(q), to_heads(k), to_heads(v), self.scale)

        o = o.reshape(B, h, N, D).transpose(0, 2, 1, 3).reshape(B, H, W, C)
        return jnp.transpose(o, (0, 3, 1, 2))                         # back to NCHW, once


# --------------------------------------------------------------------------
# Pure-JAX reference (for verification).
# --------------------------------------------------------------------------
def _reference(x_nchw, mod):
    hi = jax.lax.Precision.HIGHEST
    B, C, H, W = x_nchw.shape
    N = H * W
    x = jnp.transpose(x_nchw, (0, 2, 3, 1))                       # NHWC
    wl = mod.w_local.reshape(3, 3, 1, C)                          # HWIO, I = 1 (depthwise)
    conv = jax.lax.conv_general_dilated(
        x, wl, window_strides=(1, 1), padding="SAME",
        dimension_numbers=("NHWC", "HWIO", "NHWC"),
        feature_group_count=C, precision=hi)
    kvf = conv + mod.b_local.reshape(1, 1, 1, C) + x              # local_conv(x) + x

    xf = x.reshape(B, N, C)
    kvff = kvf.reshape(B, N, C)
    q = jnp.einsum("bnc,cd->bnd", xf, mod.wq, precision=hi) + mod.bq
    k = jnp.einsum("bnc,cd->bnd", kvff, mod.wk, precision=hi) + mod.bk
    v = jnp.einsum("bnc,cd->bnd", kvff, mod.wv, precision=hi) + mod.bv

    h, D = mod.num_heads, mod.head_dim
    def th(t):
        return t.reshape(B, N, h, D).transpose(0, 2, 1, 3)        # (B, h, N, D)
    qh, kh, vh = th(q), th(k), th(v)

    attn = jnp.einsum("bhnd,bhmd->bhnm", qh, kh, precision=hi) * mod.scale
    attn = jax.nn.softmax(attn, axis=-1)
    oh = jnp.einsum("bhnm,bhmd->bhnd", attn, vh, precision=hi)    # (B, h, N, D)
    o = oh.transpose(0, 2, 1, 3).reshape(B, H, W, C)
    return jnp.transpose(o, (0, 3, 1, 2))


if __name__ == "__main__":
    key = jax.random.PRNGKey(0)
    kx, kp = jax.random.split(key)

    B, C, H, W = 2, 64, 16, 16          # N = H*W = 256 tokens, 2 heads of dim 32
    x = jax.random.normal(kx, (B, C, H, W), jnp.float32)

    module = AttentionPallas(dim=C, num_heads=2, sr_ratio=1, key=kp)

    out = jax.block_until_ready(module(x))
    ref = jax.block_until_ready(_reference(x, module))

    assert out.shape == (B, C, H, W)
    assert jnp.allclose(out, ref, atol=2e-3, rtol=2e-3), float(jnp.max(jnp.abs(out - ref)))

    print("KERNEL_OK")
</pallas_src>

<mosaic_0001>
module attributes {stable_mosaic.version = 11 : i64} {
  func.func @_dwconv3_res_kernel(%arg0: i32, %arg1: memref<1x18x18x64xf32, #tpu.memory_space<vmem>>, %arg2: memref<3x3x64xf32, #tpu.memory_space<vmem>>, %arg3: memref<1x1x64xf32, #tpu.memory_space<vmem>>, %arg4: memref<1x16x16x64xf32, #tpu.memory_space<vmem>>) attributes {dimension_semantics = [#tpu.dimension_semantics<parallel>], iteration_bounds = array<i64: 2>, scalar_prefetch = 0 : i64, scratch_operands = 0 : i64, tpu.core_type = #tpu.core_type<tc>, window_params = [{transform_indices = @transform_0, window_bounds = array<i64: 1, 18, 18, 64>}, {pipeline_mode = #tpu.pipeline_mode<synchronous>, transform_indices = @transform_1, window_bounds = array<i64: 3, 3, 64>}, {pipeline_mode = #tpu.pipeline_mode<synchronous>, transform_indices = @transform_2, window_bounds = array<i64: 1, 1, 64>}, {transform_indices = @transform_3, window_bounds = array<i64: 1, 16, 16, 64>}]} {
    %c0 = arith.constant 0 : index
    %c0_0 = arith.constant 0 : index
    %c0_1 = arith.constant 0 : index
    %0 = vector.load %arg3[%c0, %c0_0, %c0_1] : memref<1x1x64xf32, #tpu.memory_space<vmem>>, vector<1x1x64xf32>
    %1 = vector.shape_cast %0 : vector<1x1x64xf32> to vector<64xf32>
    %c0_2 = arith.constant 0 : index
    %c1 = arith.constant 1 : index
    %c1_3 = arith.constant 1 : index
    %c0_4 = arith.constant 0 : index
    %2 = vector.load %arg1[%c0_2, %c1, %c1_3, %c0_4] : memref<1x18x18x64xf32, #tpu.memory_space<vmem>>, vector<1x16x16x64xf32>
    %3 = vector.shape_cast %2 : vector<1x16x16x64xf32> to vector<16x16x64xf32>
    %4 = vector.shape_cast %1 : vector<64xf32> to vector<1x1x64xf32>
    %5 = vector.broadcast %4 : vector<1x1x64xf32> to vector<16x16x64xf32>
    %6 = arith.addf %3, %5 : vector<16x16x64xf32>
    %c0_5 = arith.constant 0 : index
    %c0_6 = arith.constant 0 : index
    %c0_7 = arith.constant 0 : index
    %c0_8 = arith.constant 0 : index
    %7 = vector.load %arg1[%c0_5, %c0_6, %c0_7, %c0_8] : memref<1x18x18x64xf32, #tpu.memory_space<vmem>>, vector<1x16x16x64xf32>
    %8 = vector.shape_cast %7 : vector<1x16x16x64xf32> to vector<16x16x64xf32>
    %c0_9 = arith.constant 0 : index
    %c0_10 = arith.constant 0 : index
    %c0_11 = arith.constant 0 : index
    %9 = vector.load %arg2[%c0_9, %c0_10, %c0_11] : memref<3x3x64xf32, #tpu.memory_space<vmem>>, vector<1x1x64xf32>
    %10 = vector.shape_cast %9 : vector<1x1x64xf32> to vector<64xf32>
    %11 = vector.shape_cast %10 : vector<64xf32> to vector<1x1x64xf32>
    %12 = vector.broadcast %11 : vector<1x1x64xf32> to vector<16x16x64xf32>
    %13 = arith.mulf %8, %12 : vector<16x16x64xf32>
    %14 = arith.addf %6, %13 : vector<16x16x64xf32>
    %c0_12 = arith.constant 0 : index
    %c0_13 = arith.constant 0 : index
    %c1_14 = arith.constant 1 : index
    %c0_15 = arith.constant 0 : index
    %15 = vector.load %arg1[%c0_12, %c0_13, %c1_14, %c0_15] : memref<1x18x18x64xf32, #tpu.memory_space<vmem>>, vector<1x16x16x64xf32>
    %16 = vector.shape_cast %15 : vector<1x16x16x64xf32> to vector<16x16x64xf32>
    %c0_16 = arith.constant 0 : index
    %c1_17 = arith.constant 1 : index
    %c0_18 = arith.constant 0 : index
    %17 = vector.load %arg2[%c0_16, %c1_17, %c0_18] : memref<3x3x64xf32, #tpu.memory_space<vmem>>, vector<1x1x64xf32>
    %18 = vector.shape_cast %17 : vector<1x1x64xf32> to vector<64xf32>
    %19 = vector.shape_cast %18 : vector<64xf32> to vector<1x1x64xf32>
    %20 = vector.broadcast %19 : vector<1x1x64xf32> to vector<16x16x64xf32>
    %21 = arith.mulf %16, %20 : vector<16x16x64xf32>
    %22 = arith.addf %14, %21 : vector<16x16x64xf32>
    %c0_19 = arith.constant 0 : index
    %c0_20 = arith.constant 0 : index
    %c2 = arith.constant 2 : index
    %c0_21 = arith.constant 0 : index
    %23 = vector.load %arg1[%c0_19, %c0_20, %c2, %c0_21] : memref<1x18x18x64xf32, #tpu.memory_space<vmem>>, vector<1x16x16x64xf32>
    %24 = vector.shape_cast %23 : vector<1x16x16x64xf32> to vector<16x16x64xf32>
    %c0_22 = arith.constant 0 : index
    %c2_23 = arith.constant 2 : index
    %c0_24 = arith.constant 0 : index
    %25 = vector.load %arg2[%c0_22, %c2_23, %c0_24] : memref<3x3x64xf32, #tpu.memory_space<vmem>>, vector<1x1x64xf32>
    %26 = vector.shape_cast %25 : vector<1x1x64xf32> to vector<64xf32>
    %27 = vector.shape_cast %26 : vector<64xf32> to vector<1x1x64xf32>
    %28 = vector.broadcast %27 : vector<1x1x64xf32> to vector<16x16x64xf32>
    %29 = arith.mulf %24, %28 : vector<16x16x64xf32>
    %30 = arith.addf %22, %29 : vector<16x16x64xf32>
    %c0_25 = arith.constant 0 : index
    %c1_26 = arith.constant 1 : index
    %c0_27 = arith.constant 0 : index
    %c0_28 = arith.constant 0 : index
    %31 = vector.load %arg1[%c0_25, %c1_26, %c0_27, %c0_28] : memref<1x18x18x64xf32, #tpu.memory_space<vmem>>, vector<1x16x16x64xf32>
    %32 = vector.shape_cast %31 : vector<1x16x16x64xf32> to vector<16x16x64xf32>
    %c1_29 = arith.constant 1 : index
    %c0_30 = arith.constant 0 : index
    %c0_31 = arith.constant 0 : index
    %33 = vector.load %arg2[%c1_29, %c0_30, %c0_31] : memref<3x3x64xf32, #tpu.memory_space<vmem>>, vector<1x1x64xf32>
    %34 = vector.shape_cast %33 : vector<1x1x64xf32> to vector<64xf32>
    %35 = vector.shape_cast %34 : vector<64xf32> to vector<1x1x64xf32>
    %36 = vector.broadcast %35 : vector<1x1x64xf32> to vector<16x16x64xf32>
    %37 = arith.mulf %32, %36 : vector<16x16x64xf32>
    %38 = arith.addf %30, %37 : vector<16x16x64xf32>
    %c0_32 = arith.constant 0 : index
    %c1_33 = arith.constant 1 : index
    %c1_34 = arith.constant 1 : index
    %c0_35 = arith.constant 0 : index
    %39 = vector.load %arg1[%c0_32, %c1_33, %c1_34, %c0_35] : memref<1x18x18x64xf32, #tpu.memory_space<vmem>>, vector<1x16x16x64xf32>
    %40 = vector.shape_cast %39 : vector<1x16x16x64xf32> to vector<16x16x64xf32>
    %c1_36 = arith.constant 1 : index
    %c1_37 = arith.constant 1 : index
    %c0_38 = arith.constant 0 : index
    %41 = vector.load %arg2[%c1_36, %c1_37, %c0_38] : memref<3x3x64xf32, #tpu.memory_space<vmem>>, vector<1x1x64xf32>
    %42 = vector.shape_cast %41 : vector<1x1x64xf32> to vector<64xf32>
    %43 = vector.shape_cast %42 : vector<64xf32> to vector<1x1x64xf32>
    %44 = vector.broadcast %43 : vector<1x1x64xf32> to vector<16x16x64xf32>
    %45 = arith.mulf %40, %44 : vector<16x16x64xf32>
    %46 = arith.addf %38, %45 : vector<16x16x64xf32>
    %c0_39 = arith.constant 0 : index
    %c1_40 = arith.constant 1 : index
    %c2_41 = arith.constant 2 : index
    %c0_42 = arith.constant 0 : index
    %47 = vector.load %arg1[%c0_39, %c1_40, %c2_41, %c0_42] : memref<1x18x18x64xf32, #tpu.memory_space<vmem>>, vector<1x16x16x64xf32>
    %48 = vector.shape_cast %47 : vector<1x16x16x64xf32> to vector<16x16x64xf32>
    %c1_43 = arith.constant 1 : index
    %c2_44 = arith.constant 2 : index
    %c0_45 = arith.constant 0 : index
    %49 = vector.load %arg2[%c1_43, %c2_44, %c0_45] : memref<3x3x64xf32, #tpu.memory_space<vmem>>, vector<1x1x64xf32>
    %50 = vector.shape_cast %49 : vector<1x1x64xf32> to vector<64xf32>
    %51 = vector.shape_cast %50 : vector<64xf32> to vector<1x1x64xf32>
    %52 = vector.broadcast %51 : vector<1x1x64xf32> to vector<16x16x64xf32>
    %53 = arith.mulf %48, %52 : vector<16x16x64xf32>
    %54 = arith.addf %46, %53 : vector<16x16x64xf32>
    %c0_46 = arith.constant 0 : index
    %c2_47 = arith.constant 2 : index
    %c0_48 = arith.constant 0 : index
    %c0_49 = arith.constant 0 : index
    %55 = vector.load %arg1[%c0_46, %c2_47, %c0_48, %c0_49] : memref<1x18x18x64xf32, #tpu.memory_space<vmem>>, vector<1x16x16x64xf32>
    %56 = vector.shape_cast %55 : vector<1x16x16x64xf32> to vector<16x16x64xf32>
    %c2_50 = arith.constant 2 : index
    %c0_51 = arith.constant 0 : index
    %c0_52 = arith.constant 0 : index
    %57 = vector.load %arg2[%c2_50, %c0_51, %c0_52] : memref<3x3x64xf32, #tpu.memory_space<vmem>>, vector<1x1x64xf32>
    %58 = vector.shape_cast %57 : vector<1x1x64xf32> to vector<64xf32>
    %59 = vector.shape_cast %58 : vector<64xf32> to vector<1x1x64xf32>
    %60 = vector.broadcast %59 : vector<1x1x64xf32> to vector<16x16x64xf32>
    %61 = arith.mulf %56, %60 : vector<16x16x64xf32>
    %62 = arith.addf %54, %61 : vector<16x16x64xf32>
    %c0_53 = arith.constant 0 : index
    %c2_54 = arith.constant 2 : index
    %c1_55 = arith.constant 1 : index
    %c0_56 = arith.constant 0 : index
    %63 = vector.load %arg1[%c0_53, %c2_54, %c1_55, %c0_56] : memref<1x18x18x64xf32, #tpu.memory_space<vmem>>, vector<1x16x16x64xf32>
    %64 = vector.shape_cast %63 : vector<1x16x16x64xf32> to vector<16x16x64xf32>
    %c2_57 = arith.constant 2 : index
    %c1_58 = arith.constant 1 : index
    %c0_59 = arith.constant 0 : index
    %65 = vector.load %arg2[%c2_57, %c1_58, %c0_59] : memref<3x3x64xf32, #tpu.memory_space<vmem>>, vector<1x1x64xf32>
    %66 = vector.shape_cast %65 : vector<1x1x64xf32> to vector<64xf32>
    %67 = vector.shape_cast %66 : vector<64xf32> to vector<1x1x64xf32>
    %68 = vector.broadcast %67 : vector<1x1x64xf32> to vector<16x16x64xf32>
    %69 = arith.mulf %64, %68 : vector<16x16x64xf32>
    %70 = arith.addf %62, %69 : vector<16x16x64xf32>
    %c0_60 = arith.constant 0 : index
    %c2_61 = arith.constant 2 : index
    %c2_62 = arith.constant 2 : index
    %c0_63 = arith.constant 0 : index
    %71 = vector.load %arg1[%c0_60, %c2_61, %c2_62, %c0_63] : memref<1x18x18x64xf32, #tpu.memory_space<vmem>>, vector<1x16x16x64xf32>
    %72 = vector.shape_cast %71 : vector<1x16x16x64xf32> to vector<16x16x64xf32>
    %c2_64 = arith.constant 2 : index
    %c2_65 = arith.constant 2 : index
    %c0_66 = arith.constant 0 : index
    %73 = vector.load %arg2[%c2_64, %c2_65, %c0_66] : memref<3x3x64xf32, #tpu.memory_space<vmem>>, vector<1x1x64xf32>
    %74 = vector.shape_cast %73 : vector<1x1x64xf32> to vector<64xf32>
    %75 = vector.shape_cast %74 : vector<64xf32> to vector<1x1x64xf32>
    %76 = vector.broadcast %75 : vector<1x1x64xf32> to vector<16x16x64xf32>
    %77 = arith.mulf %72, %76 : vector<16x16x64xf32>
    %78 = arith.addf %70, %77 : vector<16x16x64xf32>
    %c0_67 = arith.constant 0 : index
    %c0_68 = arith.constant 0 : index
    %c0_69 = arith.constant 0 : index
    %c0_70 = arith.constant 0 : index
    %79 = vector.load %arg4[%c0_67, %c0_68, %c0_69, %c0_70] : memref<1x16x16x64xf32, #tpu.memory_space<vmem>>, vector<1x16x16x64xf32>
    %80 = vector.shape_cast %79 : vector<1x16x16x64xf32> to vector<16x16x64xf32>
    %81 = vector.shape_cast %78 : vector<16x16x64xf32> to vector<1x16x16x64xf32>
    tpu.vector_store %arg4[%c0_67, %c0_68, %c0_69, %c0_70], %81 {strides = array<i32>} : memref<1x16x16x64xf32, #tpu.memory_space<vmem>>, vector<1x16x16x64xf32>,
    return
  }
  func.func @transform_0(%arg0: i32) -> (i32, i32, i32, i32) {
    %c0_i32 = arith.constant 0 : i32
    %c0_i32_0 = arith.constant 0 : i32
    %c0_i32_1 = arith.constant 0 : i32
    %c0_i32_2 = arith.constant 0 : i32
    return %arg0, %c0_i32, %c0_i32_0, %c0_i32_1 : i32, i32, i32, i32
  }
  func.func @transform_1(%arg0: i32) -> (i32, i32, i32) {
    %c0_i32 = arith.constant 0 : i32
    %c0_i32_0 = arith.constant 0 : i32
    %c0_i32_1 = arith.constant 0 : i32
    %c0_i32_2 = arith.constant 0 : i32
    return %c0_i32, %c0_i32_0, %c0_i32_1 : i32, i32, i32
  }
  func.func @transform_2(%arg0: i32) -> (i32, i32, i32) {
    %c0_i32 = arith.constant 0 : i32
    %c0_i32_0 = arith.constant 0 : i32
    %c0_i32_1 = arith.constant 0 : i32
    %c0_i32_2 = arith.constant 0 : i32
    return %c0_i32, %c0_i32_0, %c0_i32_1 : i32, i32, i32
  }
  func.func @transform_3(%arg0: i32) -> (i32, i32, i32, i32) {
    %c0_i32 = arith.constant 0 : i32
    %c0_i32_0 = arith.constant 0 : i32
    %c0_i32_1 = arith.constant 0 : i32
    %c0_i32_2 = arith.constant 0 : i32
    return %arg0, %c0_i32, %c0_i32_0, %c0_i32_1 : i32, i32, i32, i32
  }
}

</mosaic_0001>

<llo_original>
// kernel: tpu_custom_call.1
$region0: #{tpu_custom_call.1}
  #allocation0 [shape = 'u32[]', space=smem, size = 0x4, offset = 0x4, fixed_abs, tag = 'smem constant byte address 0x4 - core index']
  #allocation1 [shape = 'u32[144,128]{1,0:T(1,128)}', space=vmem, size = 0x12000, scoped, tag = 'internal scratch']
  %s0 = inlined_call_operand.vmem [shape: f32[2,18,18,64], index: 0, kind: input, shape index: {}]
  %s1 = inlined_call_operand.vmem [shape: f32[3,3,64], index: 1, kind: input, shape index: {}]
  %s2 = inlined_call_operand.vmem [shape: f32[1,1,64], index: 2, kind: input, shape index: {}]
  %s3 = inlined_call_operand.hbm [shape: f32[2,16,16,64], index: 3, kind: output, shape index: {}]
  %s4 = sld [smem:[#allocation0]]
  $region45: #{tpu_custom_call.1} parent=0
    _
  %s6 = ssub.s32 1, %s4
  %s7 = scalar_select 0, %s6, %s4
  $region1: #{tpu_custom_call.1} parent=0
    #allocation2 [shape = 'u8[262144]{0}', space=vmem, size = 0x40000, scoped, tag = 'output window, operand 0']
    #allocation3 [shape = 's32[2]{0}', space=sflag, size = 0x8, scoped, tag = 'scoped memory for tpu_custom_call.1']
    %8 = vsyncpa [#allocation3], 0
    %s9 = scalar_lea.sflag [#allocation3], 1
    %10 = vsyncpa %s9, 0
    loop: start=0, step=1, limit=4
    $region2: #{tpu_custom_call.1} parent=1 // loop_pre_header
      _
    $region3: #{tpu_custom_call.1} parent=1 // loop_header
      %s12 = sphi 0, %s16
      %p13 = scmp.ge.s32.totalorder %s12, 4
      %s22 = sphi 0, %s24
      %s25 = sphi 0, %s22
      %s26 = sphi 0, %s25
      %s42 = sphi 0, %s26
      %s46 = sphi 0, %s46
      %s48 = sphi 0, %s46
      %s49 = sphi 0, %s48
      %s63 = sphi 0, %s49
      %s67 = sphi 0, %s67
      %s69 = sphi 0, %s67
      %s70 = sphi 0, %s69
      %s84 = sphi 0, %s70
      %s90 = sphi 0, %s92
      %s93 = sphi 0, %s90
      %s94 = sphi 0, %s93
      %s110 = sphi 0, %s94
    $region4: #{tpu_custom_call.1} parent=1 // loop_header_branch
      %15 = sbr.rel (%p13) target = $region8
    $region5: #{tpu_custom_call.1} parent=1 // loop_body
      %s17 = ssub.s32 %s12, 1
      %s18 = ssub.s32 %s12, 2
      %s19 = sadd.s32 %s12, 1
      %s20 = ssub.s32 %s12, %s19
      %p21 = scmp.eq.s32.totalorder %s20, 0
      %s23 = sadd.s32 %s22, 1
      %s24 = scalar_select %p21, %s22, %s23
      %p27 = pneg %p21
      %p28 = scmp.eq.s32.totalorder %s12, 1
      %p29 = por %p27, %p28
      %p30 = scmp.ne.s32.totalorder %s22, %s25
      %p31 = scmp.eq.s32.totalorder %s12, 0
      %p32 = por %p30, %p31
      %p33 = scmp.ne.s32.totalorder %s22, %s25
      %p34 = scmp.eq.s32.totalorder %s17, 1
      %p35 = por %p33, %p34
      %p36 = scmp.ne.s32.totalorder %s25, %s26
      %p37 = scmp.eq.s32.totalorder %s17, 0
      %p38 = por %p36, %p37
      %p39 = scmp.ne.s32.totalorder %s25, %s26
      %p40 = scmp.eq.s32.totalorder %s18, 1
      %p41 = por %p39, %p40
      %p43 = scmp.ne.s32.totalorder %s26, %s42
      %p44 = scmp.eq.s32.totalorder %s18, 0
      %p45 = por %p43, %p44
      %s47 = sadd.s32 %s46, 1
      %p50 = scmp.eq.s32.totalorder %s12, 1
      %p51 = scmp.ne.s32.totalorder %s46, %s48
      %p52 = scmp.eq.s32.totalorder %s12, 0
      %p53 = por %p51, %p52
      %p54 = scmp.ne.s32.totalorder %s46, %s48
      %p55 = scmp.eq.s32.totalorder %s17, 1
      %p56 = por %p54, %p55
      %p57 = scmp.ne.s32.totalorder %s48, %s49
      %p58 = scmp.eq.s32.totalorder %s17, 0
      %p59 = por %p57, %p58
      %p60 = scmp.ne.s32.totalorder %s48, %s49
      %p61 = scmp.eq.s32.totalorder %s18, 1
      %p62 = por %p60, %p61
      %p64 = scmp.ne.s32.totalorder %s49, %s63
      %p65 = scmp.eq.s32.totalorder %s18, 0
      %p66 = por %p64, %p65
      %s68 = sadd.s32 %s67, 1
      %p71 = scmp.eq.s32.totalorder %s12, 1
      %p72 = scmp.ne.s32.totalorder %s67, %s69
      %p73 = scmp.eq.s32.totalorder %s12, 0
      %p74 = por %p72, %p73
      %p75 = scmp.ne.s32.totalorder %s67, %s69
      %p76 = scmp.eq.s32.totalorder %s17, 1
      %p77 = por %p75, %p76
      %p78 = scmp.ne.s32.totalorder %s69, %s70
      %p79 = scmp.eq.s32.totalorder %s17, 0
      %p80 = por %p78, %p79
      %p81 = scmp.ne.s32.totalorder %s69, %s70
      %p82 = scmp.eq.s32.totalorder %s18, 1
      %p83 = por %p81, %p82
      %p85 = scmp.ne.s32.totalorder %s70, %s84
      %p86 = scmp.eq.s32.totalorder %s18, 0
      %p87 = por %p85, %p86
      %s88 = ssub.s32 %s12, %s19
      %p89 = scmp.eq.s32.totalorder %s88, 0
      %s91 = sadd.s32 %s90, 1
      %s92 = scalar_select %p89, %s90, %s91
      %p95 = pneg %p89
      %p96 = scmp.eq.s32.totalorder %s12, 1
      %p97 = por %p95, %p96
      %p98 = scmp.ne.s32.totalorder %s90, %s93
      %p99 = scmp.eq.s32.totalorder %s12, 0
      %p100 = por %p98, %p99
      %p101 = scmp.ne.s32.totalorder %s90, %s93
      %p102 = scmp.eq.s32.totalorder %s17, 1
      %p103 = por %p101, %p102
      %p104 = scmp.ne.s32.totalorder %s93, %s94
      %p105 = scmp.eq.s32.totalorder %s17, 0
      %p106 = por %p104, %p105
      %p107 = scmp.ne.s32.totalorder %s93, %s94
      %p108 = scmp.eq.s32.totalorder %s18, 1
      %p109 = por %p107, %p108
      %p111 = scmp.ne.s32.totalorder %s94, %s110
      %p112 = scmp.eq.s32.totalorder %s18, 0
      %p113 = por %p111, %p112
      %p114 = scmp.le.s32.totalorder 1, %s12
      %p115 = scmp.lt.s32.totalorder %s12, 3
      %p116 = pnand %p114, %p115
      %p117 = pneg %p116
      // Predicated region
      $region9: #{tpu_custom_call.1} parent=5 // pred_check
        _
      $region10: #{tpu_custom_call.1} parent=5 // pred_check_branch
        %119 = sbr.rel (%p116) target = $region12
      $region11: #{tpu_custom_call.1} parent=5 // pred_region
        %s120 = ssub.s32 %s12, 1
        // Predicated region
        $region13: #{tpu_custom_call.1} parent=11 // pred_check
          %p121 = pneg %p59
        $region14: #{tpu_custom_call.1} parent=11 // pred_check_branch
          %123 = sbr.rel (%p121) target = $region16
        $region15: #{tpu_custom_call.1} parent=11 // pred_region
          _
        $region16: #{tpu_custom_call.1} parent=11 // pred_fallthru
          _
        // Predicated region
        $region17: #{tpu_custom_call.1} parent=11 // pred_check
          %p124 = pneg %p80
        $region18: #{tpu_custom_call.1} parent=11 // pred_check_branch
          %126 = sbr.rel (%p124) target = $region20
        $region19: #{tpu_custom_call.1} parent=11 // pred_region
          _
        $region20: #{tpu_custom_call.1} parent=11 // pred_fallthru
          _
      $region12: #{tpu_custom_call.1} parent=5 // pred_fallthru
        _
      %p127 = scmp.lt.s32.totalorder %s12, 2
      // Predicated region
      $region21: #{tpu_custom_call.1} parent=5 // pred_check
        %p128 = pneg %p127
      $region22: #{tpu_custom_call.1} parent=5 // pred_check_branch
        %130 = sbr.rel (%p128) target = $region24
      $region23: #{tpu_custom_call.1} parent=5 // pred_region
        // Predicated region
        $region25: #{tpu_custom_call.1} parent=23 // pred_check
          %p131 = pneg %p32
        $region26: #{tpu_custom_call.1} parent=23 // pred_check_branch
          %133 = sbr.rel (%p131) target = $region28
        $region27: #{tpu_custom_call.1} parent=23 // pred_region
          %p134 = scmp.lt.s32.totalorder %s12, 1
          %s135 = scalar_select %p134, %s12, 1
          %s136 = smul.addr %s135, 54
          %s137 = smul.addr %s136, 8
          %s138 = scalar_lea.vmem %s0, %s137
        $region28: #{tpu_custom_call.1} parent=23 // pred_fallthru
          _
      $region24: #{tpu_custom_call.1} parent=5 // pred_fallthru
        _
      %p139 = scmp.le.s32.totalorder 1, %s12
      %p140 = scmp.lt.s32.totalorder %s12, 3
      %p141 = pnand %p139, %p140
      %p142 = pneg %p141
      // Predicated region
      $region29: #{tpu_custom_call.1} parent=5 // pred_check
        _
      $region30: #{tpu_custom_call.1} parent=5 // pred_check_branch
        %144 = sbr.rel (%p141) target = $region32
      $region31: #{tpu_custom_call.1} parent=5 // pred_region
        %s145 = ssub.s32 %s12, 1
        %p146 = scmp.lt.s32.totalorder %s17, 1
        %s147 = scalar_select %p146, %s17, 1
        %s148 = smul.addr %s147, 54
        %s149 = smul.addr %s148, 8
        %s150 = scalar_lea.vmem %s0, %s149
        %p151 = pneg %p38
        %p152 = pneg %p35
        %p153 = pneg %p59
        %p154 = pneg %p56
        %p155 = pneg %p80
        %p156 = pneg %p77
        %p157 = pneg %p106
        %p158 = pneg %p103
        %s159 = sand.u32 %s93, 1
        %s160 = scalar_lea.sflag [#allocation3], %s159
        %s161 = sand.u32 %s93, 1
        %s162 = smul.addr %s161, 256
        %s163 = scalar_lea.vmem [#allocation2], %s162
        %p164 = scmp.lt.s32.totalorder %s17, 1
        %s165 = scalar_select %p164, %s17, 1
        %s166 = smul.addr %s165, 54
        %s167 = smul.addr %s166, 8
        %s168 = scalar_lea.vmem %s0, %s167
        %v169 = vld [vmem:[%s2] sm:$0x1]
        %s170 = scalar_lea.vmem %s168, 24
        %v171 = vld [vmem:[%s170 + $0x1] sm:$0xff]
        %v172 = vld [vmem:[%s170 + $0x9] sm:$0xff]
        %v173 = vld [vmem:[%s170 + $0x19] sm:$0xff]
        %v174 = vld [vmem:[%s170 + $0x21] sm:$0xff]
        %v175 = vld [vmem:[%s170 + $0x31] sm:$0xff]
        %v176 = vld [vmem:[%s170 + $0x39] sm:$0xff]
        %v177 = vld [vmem:[%s170 + $0x49] sm:$0xff]
        %v178 = vld [vmem:[%s170 + $0x51] sm:$0xff]
        %v179 = vld [vmem:[%s170 + $0x61] sm:$0xff]
        %v180 = vld [vmem:[%s170 + $0x69] sm:$0xff]
        %v181 = vld [vmem:[%s170 + $0x79] sm:$0xff]
        %v182 = vld [vmem:[%s170 + $0x81] sm:$0xff]
        %v183 = vld [vmem:[%s170 + $0x91] sm:$0xff]
        %v184 = vld [vmem:[%s170 + $0x99] sm:$0xff]
        %v185 = vld [vmem:[%s170 + $0xa9] sm:$0xff]
        %v186 = vld [vmem:[%s170 + $0xb1] sm:$0xff]
        %v187 = vld [vmem:[%s170 + $0xc1] sm:$0xff]
        %v188 = vld [vmem:[%s170 + $0xc9] sm:$0xff]
        %v189 = vld [vmem:[%s170 + $0xd9] sm:$0xff]
        %v190 = vld [vmem:[%s170 + $0xe1] sm:$0xff]
        %v191 = vld [vmem:[%s170 + $0xf1] sm:$0xff]
        %v192 = vld [vmem:[%s170 + $0xf9] sm:$0xff]
        %v193 = vld [vmem:[%s170 + $0x109] sm:$0xff]
        %v194 = vld [vmem:[%s170 + $0x111] sm:$0xff]
        %v195 = vld [vmem:[%s170 + $0x121] sm:$0xff]
        %v196 = vld [vmem:[%s170 + $0x129] sm:$0xff]
        %v197 = vld [vmem:[%s170 + $0x139] sm:$0xff]
        %v198 = vld [vmem:[%s170 + $0x141] sm:$0xff]
        %v199 = vld [vmem:[%s170 + $0x151] sm:$0xff]
        %v200 = vld [vmem:[%s170 + $0x159] sm:$0xff]
        %v201 = vld [vmem:[%s170 + $0x169] sm:$0xff]
        %v202 = vld [vmem:[%s170 + $0x171] sm:$0xff]
        %v204 = vlaneseq
        %v205 = vshrl.u32 %v204, 7
        %v206 = vsub.s32 0, %v205
        %v207 = vrot.slane %v169, %v206
        %v209 = vadd.f32 %v171, %v207
        %v210 = vadd.f32 %v172, %v207
        %v211 = vadd.f32 %v173, %v207
        %v212 = vadd.f32 %v174, %v207
        %v213 = vadd.f32 %v175, %v207
        %v214 = vadd.f32 %v176, %v207
        %v215 = vadd.f32 %v177, %v207
        %v216 = vadd.f32 %v178, %v207
        %v217 = vadd.f32 %v179, %v207
        %v218 = vadd.f32 %v180, %v207
        %v219 = vadd.f32 %v181, %v207
        %v220 = vadd.f32 %v182, %v207
        %v221 = vadd.f32 %v183, %v207
        %v222 = vadd.f32 %v184, %v207
        %v223 = vadd.f32 %v185, %v207
        %v224 = vadd.f32 %v186, %v207
        %v225 = vadd.f32 %v187, %v207
        %v226 = vadd.f32 %v188, %v207
        %v227 = vadd.f32 %v189, %v207
        %v228 = vadd.f32 %v190, %v207
        %v229 = vadd.f32 %v191, %v207
        %v230 = vadd.f32 %v192, %v207
        %v231 = vadd.f32 %v193, %v207
        %v232 = vadd.f32 %v194, %v207
        %v233 = vadd.f32 %v195, %v207
        %v234 = vadd.f32 %v196, %v207
        %v235 = vadd.f32 %v197, %v207
        %v236 = vadd.f32 %v198, %v207
        %v237 = vadd.f32 %v199, %v207
        %v238 = vadd.f32 %v200, %v207
        %v239 = vadd.f32 %v201, %v207
        %v240 = vadd.f32 %v202, %v207
        %v241 = vld [vmem:[%s168] sm:$0xff]
        %v242 = vld [vmem:[%s168 + $0x8] sm:$0xff]
        %v243 = vld [vmem:[%s168 + $0x18] sm:$0xff]
        %v244 = vld [vmem:[%s168 + $0x20] sm:$0xff]
        %v245 = vld [vmem:[%s168 + $0x30] sm:$0xff]
        %v246 = vld [vmem:[%s168 + $0x38] sm:$0xff]
        %v247 = vld [vmem:[%s168 + $0x48] sm:$0xff]
        %v248 = vld [vmem:[%s168 + $0x50] sm:$0xff]
        %v249 = vld [vmem:[%s168 + $0x60] sm:$0xff]
        %v250 = vld [vmem:[%s168 + $0x68] sm:$0xff]
        %v251 = vld [vmem:[%s168 + $0x78] sm:$0xff]
        %v252 = vld [vmem:[%s168 + $0x80] sm:$0xff]
        %v253 = vld [vmem:[%s168 + $0x90] sm:$0xff]
        %v254 = vld [vmem:[%s168 + $0x98] sm:$0xff]
        %v255 = vld [vmem:[%s168 + $0xa8] sm:$0xff]
        %v256 = vld [vmem:[%s168 + $0xb0] sm:$0xff]
        %v257 = vld [vmem:[%s168 + $0xc0] sm:$0xff]
        %v258 = vld [vmem:[%s168 + $0xc8] sm:$0xff]
        %v259 = vld [vmem:[%s168 + $0xd8] sm:$0xff]
        %v260 = vld [vmem:[%s168 + $0xe0] sm:$0xff]
        %v261 = vld [vmem:[%s168 + $0xf0] sm:$0xff]
        %v262 = vld [vmem:[%s168 + $0xf8] sm:$0xff]
        %v263 = vld [vmem:[%s168 + $0x108] sm:$0xff]
        %v264 = vld [vmem:[%s168 + $0x110] sm:$0xff]
        %v265 = vld [vmem:[%s168 + $0x120] sm:$0xff]
        %v266 = vld [vmem:[%s168 + $0x128] sm:$0xff]
        %v267 = vld [vmem:[%s168 + $0x138] sm:$0xff]
        %v268 = vld [vmem:[%s168 + $0x140] sm:$0xff]
        %v269 = vld [vmem:[%s168 + $0x150] sm:$0xff]
        %v270 = vld [vmem:[%s168 + $0x158] sm:$0xff]
        %v271 = vld [vmem:[%s168 + $0x168] sm:$0xff]
        %v272 = vld [vmem:[%s168 + $0x170] sm:$0xff]
        %v273 = vld [vmem:[%s1] sm:$0x1]
        %v274 = vlaneseq
        %v275 = vshrl.u32 %v274, 7
        %v276 = vsub.s32 0, %v275
        %v277 = vrot.slane %v273, %v276
        %v278 = vmul.f32 %v241, %v277
        %v279 = vmul.f32 %v242, %v277
        %v280 = vmul.f32 %v243, %v277
        %v281 = vmul.f32 %v244, %v277
        %v282 = vmul.f32 %v245, %v277
        %v283 = vmul.f32 %v246, %v277
        %v284 = vmul.f32 %v247, %v277
        %v285 = vmul.f32 %v248, %v277
        %v286 = vmul.f32 %v249, %v277
        %v287 = vmul.f32 %v250, %v277
        %v288 = vmul.f32 %v251, %v277
        %v289 = vmul.f32 %v252, %v277
        %v290 = vmul.f32 %v253, %v277
        %v291 = vmul.f32 %v254, %v277
        %v292 = vmul.f32 %v255, %v277
        %v293 = vmul.f32 %v256, %v277
        %v294 = vmul.f32 %v257, %v277
        %v295 = vmul.f32 %v258, %v277
        %v296 = vmul.f32 %v259, %v277
        %v297 = vmul.f32 %v260, %v277
        %v298 = vmul.f32 %v261, %v277
        %v299 = vmul.f32 %v262, %v277
        %v300 = vmul.f32 %v263, %v277
        %v301 = vmul.f32 %v264, %v277
        %v302 = vmul.f32 %v265, %v277
        %v303 = vmul.f32 %v266, %v277
        %v304 = vmul.f32 %v267, %v277
        %v305 = vmul.f32 %v268, %v277
        %v306 = vmul.f32 %v269, %v277
        %v307 = vmul.f32 %v270, %v277
        %v308 = vmul.f32 %v271, %v277
        %v309 = vmul.f32 %v272, %v277
        %v310 = vadd.f32 %v209, %v278
        %v311 = vadd.f32 %v210, %v279
        %v312 = vadd.f32 %v211, %v280
        %v313 = vadd.f32 %v212, %v281
        %v314 = vadd.f32 %v213, %v282
        %v315 = vadd.f32 %v214, %v283
        %v316 = vadd.f32 %v215, %v284
        %v317 = vadd.f32 %v216, %v285
        %v318 = vadd.f32 %v217, %v286
        %v319 = vadd.f32 %v218, %v287
        %v320 = vadd.f32 %v219, %v288
        %v321 = vadd.f32 %v220, %v289
        %v322 = vadd.f32 %v221, %v290
        %v323 = vadd.f32 %v222, %v291
        %v324 = vadd.f32 %v223, %v292
        %v325 = vadd.f32 %v224, %v293
        %v326 = vadd.f32 %v225, %v294
        %v327 = vadd.f32 %v226, %v295
        %v328 = vadd.f32 %v227, %v296
        %v329 = vadd.f32 %v228, %v297
        %v330 = vadd.f32 %v229, %v298
        %v331 = vadd.f32 %v230, %v299
        %v332 = vadd.f32 %v231, %v300
        %v333 = vadd.f32 %v232, %v301
        %v334 = vadd.f32 %v233, %v302
        %v335 = vadd.f32 %v234, %v303
        %v336 = vadd.f32 %v235, %v304
        %v337 = vadd.f32 %v236, %v305
        %v338 = vadd.f32 %v237, %v306
        %v339 = vadd.f32 %v238, %v307
        %v340 = vadd.f32 %v239, %v308
        %v341 = vadd.f32 %v240, %v309
        %v342 = vld [vmem:[%s168 + $0x1] sm:$0xff]
        %v343 = vld [vmem:[%s168 + $0x9] sm:$0xff]
        %v344 = vld [vmem:[%s168 + $0x19] sm:$0xff]
        %v345 = vld [vmem:[%s168 + $0x21] sm:$0xff]
        %v346 = vld [vmem:[%s168 + $0x31] sm:$0xff]
        %v347 = vld [vmem:[%s168 + $0x39] sm:$0xff]
        %v348 = vld [vmem:[%s168 + $0x49] sm:$0xff]
        %v349 = vld [vmem:[%s168 + $0x51] sm:$0xff]
        %v350 = vld [vmem:[%s168 + $0x61] sm:$0xff]
        %v351 = vld [vmem:[%s168 + $0x69] sm:$0xff]
        %v352 = vld [vmem:[%s168 + $0x79] sm:$0xff]
        %v353 = vld [vmem:[%s168 + $0x81] sm:$0xff]
        %v354 = vld [vmem:[%s168 + $0x91] sm:$0xff]
        %v355 = vld [vmem:[%s168 + $0x99] sm:$0xff]
        %v356 = vld [vmem:[%s168 + $0xa9] sm:$0xff]
        %v357 = vld [vmem:[%s168 + $0xb1] sm:$0xff]
        %v358 = vld [vmem:[%s168 + $0xc1] sm:$0xff]
        %v359 = vld [vmem:[%s168 + $0xc9] sm:$0xff]
        %v360 = vld [vmem:[%s168 + $0xd9] sm:$0xff]
        %v361 = vld [vmem:[%s168 + $0xe1] sm:$0xff]
        %v362 = vld [vmem:[%s168 + $0xf1] sm:$0xff]
        %v363 = vld [vmem:[%s168 + $0xf9] sm:$0xff]
        %v364 = vld [vmem:[%s168 + $0x109] sm:$0xff]
        %v365 = vld [vmem:[%s168 + $0x111] sm:$0xff]
        %v366 = vld [vmem:[%s168 + $0x121] sm:$0xff]
        %v367 = vld [vmem:[%s168 + $0x129] sm:$0xff]
        %v368 = vld [vmem:[%s168 + $0x139] sm:$0xff]
        %v369 = vld [vmem:[%s168 + $0x141] sm:$0xff]
        %v370 = vld [vmem:[%s168 + $0x151] sm:$0xff]
        %v371 = vld [vmem:[%s168 + $0x159] sm:$0xff]
        %v372 = vld [vmem:[%s168 + $0x169] sm:$0xff]
        %v373 = vld [vmem:[%s168 + $0x171] sm:$0xff]
        %v374 = vld [vmem:[%s1 + $0x1] sm:$0x1]
        %v375 = vlaneseq
        %v376 = vshrl.u32 %v375, 7
        %v377 = vsub.s32 0, %v376
        %v378 = vrot.slane %v374, %v377
        %v379 = vmul.f32 %v342, %v378
        %v380 = vmul.f32 %v343, %v378
        %v381 = vmul.f32 %v344, %v378
        %v382 = vmul.f32 %v345, %v378
        %v383 = vmul.f32 %v346, %v378
        %v384 = vmul.f32 %v347, %v378
        %v385 = vmul.f32 %v348, %v378
        %v386 = vmul.f32 %v349, %v378
        %v387 = vmul.f32 %v350, %v378
        %v388 = vmul.f32 %v351, %v378
        %v389 = vmul.f32 %v352, %v378
        %v390 = vmul.f32 %v353, %v378
        %v391 = vmul.f32 %v354, %v378
        %v392 = vmul.f32 %v355, %v378
        %v393 = vmul.f32 %v356, %v378
        %v394 = vmul.f32 %v357, %v378
        %v395 = vmul.f32 %v358, %v378
        %v396 = vmul.f32 %v359, %v378
        %v397 = vmul.f32 %v360, %v378
        %v398 = vmul.f32 %v361, %v378
        %v399 = vmul.f32 %v362, %v378
        %v400 = vmul.f32 %v363, %v378
        %v401 = vmul.f32 %v364, %v378
        %v402 = vmul.f32 %v365, %v378
        %v403 = vmul.f32 %v366, %v378
        %v404 = vmul.f32 %v367, %v378
        %v405 = vmul.f32 %v368, %v378
        %v406 = vmul.f32 %v369, %v378
        %v407 = vmul.f32 %v370, %v378
        %v408 = vmul.f32 %v371, %v378
        %v409 = vmul.f32 %v372, %v378
        %v410 = vmul.f32 %v373, %v378
        %v411 = vadd.f32 %v310, %v379
        %v412 = vadd.f32 %v311, %v380
        %v413 = vadd.f32 %v312, %v381
        %v414 = vadd.f32 %v313, %v382
        %v415 = vadd.f32 %v314, %v383
        %v416 = vadd.f32 %v315, %v384
        %v417 = vadd.f32 %v316, %v385
        %v418 = vadd.f32 %v317, %v386
        %v419 = vadd.f32 %v318, %v387
        %v420 = vadd.f32 %v319, %v388
        %v421 = vadd.f32 %v320, %v389
        %v422 = vadd.f32 %v321, %v390
        %v423 = vadd.f32 %v322, %v391
        %v424 = vadd.f32 %v323, %v392
        %v425 = vadd.f32 %v324, %v393
        %v426 = vadd.f32 %v325, %v394
        %v427 = vadd.f32 %v326, %v395
        %v428 = vadd.f32 %v327, %v396
        %v429 = vadd.f32 %v328, %v397
        %v430 = vadd.f32 %v329, %v398
        %v431 = vadd.f32 %v330, %v399
        %v432 = vadd.f32 %v331, %v400
        %v433 = vadd.f32 %v332, %v401
        %v434 = vadd.f32 %v333, %v402
        %v435 = vadd.f32 %v334, %v403
        %v436 = vadd.f32 %v335, %v404
        %v437 = vadd.f32 %v336, %v405
        %v438 = vadd.f32 %v337, %v406
        %v439 = vadd.f32 %v338, %v407
        %v440 = vadd.f32 %v339, %v408
        %v441 = vadd.f32 %v340, %v409
        %v442 = vadd.f32 %v341, %v410
        %v443 = vld [vmem:[%s168 + $0x2] sm:$0xff]
        %v444 = vld [vmem:[%s168 + $0xa] sm:$0xff]
        %v445 = vld [vmem:[%s168 + $0x1a] sm:$0xff]
        %v446 = vld [vmem:[%s168 + $0x22] sm:$0xff]
        %v447 = vld [vmem:[%s168 + $0x32] sm:$0xff]
        %v448 = vld [vmem:[%s168 + $0x3a] sm:$0xff]
        %v449 = vld [vmem:[%s168 + $0x4a] sm:$0xff]
        %v450 = vld [vmem:[%s168 + $0x52] sm:$0xff]
        %v451 = vld [vmem:[%s168 + $0x62] sm:$0xff]
        %v452 = vld [vmem:[%s168 + $0x6a] sm:$0xff]
        %v453 = vld [vmem:[%s168 + $0x7a] sm:$0xff]
        %v454 = vld [vmem:[%s168 + $0x82] sm:$0xff]
        %v455 = vld [vmem:[%s168 + $0x92] sm:$0xff]
        %v456 = vld [vmem:[%s168 + $0x9a] sm:$0xff]
        %v457 = vld [vmem:[%s168 + $0xaa] sm:$0xff]
        %v458 = vld [vmem:[%s168 + $0xb2] sm:$0xff]
        %v459 = vld [vmem:[%s168 + $0xc2] sm:$0xff]
        %v460 = vld [vmem:[%s168 + $0xca] sm:$0xff]
        %v461 = vld [vmem:[%s168 + $0xda] sm:$0xff]
        %v462 = vld [vmem:[%s168 + $0xe2] sm:$0xff]
        %v463 = vld [vmem:[%s168 + $0xf2] sm:$0xff]
        %v464 = vld [vmem:[%s168 + $0xfa] sm:$0xff]
        %v465 = vld [vmem:[%s168 + $0x10a] sm:$0xff]
        %v466 = vld [vmem:[%s168 + $0x112] sm:$0xff]
        %v467 = vld [vmem:[%s168 + $0x122] sm:$0xff]
        %v468 = vld [vmem:[%s168 + $0x12a] sm:$0xff]
        %v469 = vld [vmem:[%s168 + $0x13a] sm:$0xff]
        %v470 = vld [vmem:[%s168 + $0x142] sm:$0xff]
        %v471 = vld [vmem:[%s168 + $0x152] sm:$0xff]
        %v472 = vld [vmem:[%s168 + $0x15a] sm:$0xff]
        %v473 = vld [vmem:[%s168 + $0x16a] sm:$0xff]
        %v474 = vld [vmem:[%s168 + $0x172] sm:$0xff]
        %v475 = vld [vmem:[%s1 + $0x2] sm:$0x1]
        %v476 = vlaneseq
        %v477 = vshrl.u32 %v476, 7
        %v478 = vsub.s32 0, %v477
        %v479 = vrot.slane %v475, %v478
        %v480 = vmul.f32 %v443, %v479
        %v481 = vmul.f32 %v444, %v479
        %v482 = vmul.f32 %v445, %v479
        %v483 = vmul.f32 %v446, %v479
        %v484 = vmul.f32 %v447, %v479
        %v485 = vmul.f32 %v448, %v479
        %v486 = vmul.f32 %v449, %v479
        %v487 = vmul.f32 %v450, %v479
        %v488 = vmul.f32 %v451, %v479
        %v489 = vmul.f32 %v452, %v479
        %v490 = vmul.f32 %v453, %v479
        %v491 = vmul.f32 %v454, %v479
        %v492 = vmul.f32 %v455, %v479
        %v493 = vmul.f32 %v456, %v479
        %v494 = vmul.f32 %v457, %v479
        %v495 = vmul.f32 %v458, %v479
        %v496 = vmul.f32 %v459, %v479
        %v497 = vmul.f32 %v460, %v479
        %v498 = vmul.f32 %v461, %v479
        %v499 = vmul.f32 %v462, %v479
        %v500 = vmul.f32 %v463, %v479
        %v501 = vmul.f32 %v464, %v479
        %v502 = vmul.f32 %v465, %v479
        %v503 = vmul.f32 %v466, %v479
        %v504 = vmul.f32 %v467, %v479
        %v505 = vmul.f32 %v468, %v479
        %v506 = vmul.f32 %v469, %v479
        %v507 = vmul.f32 %v470, %v479
        %v508 = vmul.f32 %v471, %v479
        %v509 = vmul.f32 %v472, %v479
        %v510 = vmul.f32 %v473, %v479
        %v511 = vmul.f32 %v474, %v479
        %v512 = vadd.f32 %v411, %v480
        %v513 = vadd.f32 %v412, %v481
        %v514 = vadd.f32 %v413, %v482
        %v515 = vadd.f32 %v414, %v483
        %v516 = vadd.f32 %v415, %v484
        %v517 = vadd.f32 %v416, %v485
        %v518 = vadd.f32 %v417, %v486
        %v519 = vadd.f32 %v418, %v487
        %v520 = vadd.f32 %v419, %v488
        %v521 = vadd.f32 %v420, %v489
        %v522 = vadd.f32 %v421, %v490
        %v523 = vadd.f32 %v422, %v491
        %v524 = vadd.f32 %v423, %v492
        %v525 = vadd.f32 %v424, %v493
        %v526 = vadd.f32 %v425, %v494
        %v527 = vadd.f32 %v426, %v495
        %v528 = vadd.f32 %v427, %v496
        %v529 = vadd.f32 %v428, %v497
        %v530 = vadd.f32 %v429, %v498
        %v531 = vadd.f32 %v430, %v499
        %v532 = vadd.f32 %v431, %v500
        %v533 = vadd.f32 %v432, %v501
        %v534 = vadd.f32 %v433, %v502
        %v535 = vadd.f32 %v434, %v503
        %v536 = vadd.f32 %v435, %v504
        %v537 = vadd.f32 %v436, %v505
        %v538 = vadd.f32 %v437, %v506
        %v539 = vadd.f32 %v438, %v507
        %v540 = vadd.f32 %v439, %v508
        %v541 = vadd.f32 %v440, %v509
        %v542 = vadd.f32 %v441, %v510
        %v543 = vadd.f32 %v442, %v511
        %v544 = vld [vmem:[%s170] sm:$0xff]
        %v545 = vld [vmem:[%s170 + $0x8] sm:$0xff]
        %v546 = vld [vmem:[%s170 + $0x18] sm:$0xff]
        %v547 = vld [vmem:[%s170 + $0x20] sm:$0xff]
        %v548 = vld [vmem:[%s170 + $0x30] sm:$0xff]
        %v549 = vld [vmem:[%s170 + $0x38] sm:$0xff]
        %v550 = vld [vmem:[%s170 + $0x48] sm:$0xff]
        %v551 = vld [vmem:[%s170 + $0x50] sm:$0xff]
        %v552 = vld [vmem:[%s170 + $0x60] sm:$0xff]
        %v553 = vld [vmem:[%s170 + $0x68] sm:$0xff]
        %v554 = vld [vmem:[%s170 + $0x78] sm:$0xff]
        %v555 = vld [vmem:[%s170 + $0x80] sm:$0xff]
        %v556 = vld [vmem:[%s170 + $0x90] sm:$0xff]
        %v557 = vld [vmem:[%s170 + $0x98] sm:$0xff]
        %v558 = vld [vmem:[%s170 + $0xa8] sm:$0xff]
        %v559 = vld [vmem:[%s170 + $0xb0] sm:$0xff]
        %v560 = vld [vmem:[%s170 + $0xc0] sm:$0xff]
        %v561 = vld [vmem:[%s170 + $0xc8] sm:$0xff]
        %v562 = vld [vmem:[%s170 + $0xd8] sm:$0xff]
        %v563 = vld [vmem:[%s170 + $0xe0] sm:$0xff]
        %v564 = vld [vmem:[%s170 + $0xf0] sm:$0xff]
        %v565 = vld [vmem:[%s170 + $0xf8] sm:$0xff]
        %v566 = vld [vmem:[%s170 + $0x108] sm:$0xff]
        %v567 = vld [vmem:[%s170 + $0x110] sm:$0xff]
        %v568 = vld [vmem:[%s170 + $0x120] sm:$0xff]
        %v569 = vld [vmem:[%s170 + $0x128] sm:$0xff]
        %v570 = vld [vmem:[%s170 + $0x138] sm:$0xff]
        %v571 = vld [vmem:[%s170 + $0x140] sm:$0xff]
        %v572 = vld [vmem:[%s170 + $0x150] sm:$0xff]
        %v573 = vld [vmem:[%s170 + $0x158] sm:$0xff]
        %v574 = vld [vmem:[%s170 + $0x168] sm:$0xff]
        %v575 = vld [vmem:[%s170 + $0x170] sm:$0xff]
        %s576 = scalar_lea.vmem %s1, 4
        %v577 = vld [vmem:[%s576] sm:$0x1]
        %v578 = vlaneseq
        %v579 = vshrl.u32 %v578, 7
        %v580 = vsub.s32 0, %v579
        %v581 = vrot.slane %v577, %v580
        %v582 = vmul.f32 %v544, %v581
        %v583 = vmul.f32 %v545, %v581
        %v584 = vmul.f32 %v546, %v581
        %v585 = vmul.f32 %v547, %v581
        %v586 = vmul.f32 %v548, %v581
        %v587 = vmul.f32 %v549, %v581
        %v588 = vmul.f32 %v550, %v581
        %v589 = vmul.f32 %v551, %v581
        %v590 = vmul.f32 %v552, %v581
        %v591 = vmul.f32 %v553, %v581
        %v592 = vmul.f32 %v554, %v581
        %v593 = vmul.f32 %v555, %v581
        %v594 = vmul.f32 %v556, %v581
        %v595 = vmul.f32 %v557, %v581
        %v596 = vmul.f32 %v558, %v581
        %v597 = vmul.f32 %v559, %v581
        %v598 = vmul.f32 %v560, %v581
        %v599 = vmul.f32 %v561, %v581
        %v600 = vmul.f32 %v562, %v581
        %v601 = vmul.f32 %v563, %v581
        %v602 = vmul.f32 %v564, %v581
        %v603 = vmul.f32 %v565, %v581
        %v604 = vmul.f32 %v566, %v581
        %v605 = vmul.f32 %v567, %v581
        %v606 = vmul.f32 %v568, %v581
        %v607 = vmul.f32 %v569, %v581
        %v608 = vmul.f32 %v570, %v581
        %v609 = vmul.f32 %v571, %v581
        %v610 = vmul.f32 %v572, %v581
        %v611 = vmul.f32 %v573, %v581
        %v612 = vmul.f32 %v574, %v581
        %v613 = vmul.f32 %v575, %v581
        %v614 = vadd.f32 %v512, %v582
        %v615 = vadd.f32 %v513, %v583
        %v616 = vadd.f32 %v514, %v584
        %v617 = vadd.f32 %v515, %v585
        %v618 = vadd.f32 %v516, %v586
        %v619 = vadd.f32 %v517, %v587
        %v620 = vadd.f32 %v518, %v588
        %v621 = vadd.f32 %v519, %v589
        %v622 = vadd.f32 %v520, %v590
        %v623 = vadd.f32 %v521, %v591
        %v624 = vadd.f32 %v522, %v592
        %v625 = vadd.f32 %v523, %v593
        %v626 = vadd.f32 %v524, %v594
        %v627 = vadd.f32 %v525, %v595
        %v628 = vadd.f32 %v526, %v596
        %v629 = vadd.f32 %v527, %v597
        %v630 = vadd.f32 %v528, %v598
        %v631 = vadd.f32 %v529, %v599
        %v632 = vadd.f32 %v530, %v600
        %v633 = vadd.f32 %v531, %v601
        %v634 = vadd.f32 %v532, %v602
        %v635 = vadd.f32 %v533, %v603
        %v636 = vadd.f32 %v534, %v604
        %v637 = vadd.f32 %v535, %v605
        %v638 = vadd.f32 %v536, %v606
        %v639 = vadd.f32 %v537, %v607
        %v640 = vadd.f32 %v538, %v608
        %v641 = vadd.f32 %v539, %v609
        %v642 = vadd.f32 %v540, %v610
        %v643 = vadd.f32 %v541, %v611
        %v644 = vadd.f32 %v542, %v612
        %v645 = vadd.f32 %v543, %v613
        %v646 = vld [vmem:[%s576 + $0x1] sm:$0x1]
        %v647 = vlaneseq
        %v648 = vshrl.u32 %v647, 7
        %v649 = vsub.s32 0, %v648
        %v650 = vrot.slane %v646, %v649
        %v651 = vmul.f32 %v171, %v650
        %v652 = vmul.f32 %v172, %v650
        %v653 = vmul.f32 %v173, %v650
        %v654 = vmul.f32 %v174, %v650
        %v655 = vmul.f32 %v175, %v650
        %v656 = vmul.f32 %v176, %v650
        %v657 = vmul.f32 %v177, %v650
        %v658 = vmul.f32 %v178, %v650
        %v659 = vmul.f32 %v179, %v650
        %v660 = vmul.f32 %v180, %v650
        %v661 = vmul.f32 %v181, %v650
        %v662 = vmul.f32 %v182, %v650
        %v663 = vmul.f32 %v183, %v650
        %v664 = vmul.f32 %v184, %v650
        %v665 = vmul.f32 %v185, %v650
        %v666 = vmul.f32 %v186, %v650
        %v667 = vmul.f32 %v187, %v650
        %v668 = vmul.f32 %v188, %v650
        %v669 = vmul.f32 %v189, %v650
        %v670 = vmul.f32 %v190, %v650
        %v671 = vmul.f32 %v191, %v650
        %v672 = vmul.f32 %v192, %v650
        %v673 = vmul.f32 %v193, %v650
        %v674 = vmul.f32 %v194, %v650
        %v675 = vmul.f32 %v195, %v650
        %v676 = vmul.f32 %v196, %v650
        %v677 = vmul.f32 %v197, %v650
        %v678 = vmul.f32 %v198, %v650
        %v679 = vmul.f32 %v199, %v650
        %v680 = vmul.f32 %v200, %v650
        %v681 = vmul.f32 %v201, %v650
        %v682 = vmul.f32 %v202, %v650
        %v683 = vadd.f32 %v614, %v651
        %v684 = vadd.f32 %v615, %v652
        %v685 = vadd.f32 %v616, %v653
        %v686 = vadd.f32 %v617, %v654
        %v687 = vadd.f32 %v618, %v655
        %v688 = vadd.f32 %v619, %v656
        %v689 = vadd.f32 %v620, %v657
        %v690 = vadd.f32 %v621, %v658
        %v691 = vadd.f32 %v622, %v659
        %v692 = vadd.f32 %v623, %v660
        %v693 = vadd.f32 %v624, %v661
        %v694 = vadd.f32 %v625, %v662
        %v695 = vadd.f32 %v626, %v663
        %v696 = vadd.f32 %v627, %v664
        %v697 = vadd.f32 %v628, %v665
        %v698 = vadd.f32 %v629, %v666
        %v699 = vadd.f32 %v630, %v667
        %v700 = vadd.f32 %v631, %v668
        %v701 = vadd.f32 %v632, %v669
        %v702 = vadd.f32 %v633, %v670
        %v703 = vadd.f32 %v634, %v671
        %v704 = vadd.f32 %v635, %v672
        %v705 = vadd.f32 %v636, %v673
        %v706 = vadd.f32 %v637, %v674
        %v707 = vadd.f32 %v638, %v675
        %v708 = vadd.f32 %v639, %v676
        %v709 = vadd.f32 %v640, %v677
        %v710 = vadd.f32 %v641, %v678
        %v711 = vadd.f32 %v642, %v679
        %v712 = vadd.f32 %v643, %v680
        %v713 = vadd.f32 %v644, %v681
        %v714 = vadd.f32 %v645, %v682
        %v715 = vld [vmem:[%s170 + $0x2] sm:$0xff]
        %v716 = vld [vmem:[%s170 + $0xa] sm:$0xff]
        %v717 = vld [vmem:[%s170 + $0x1a] sm:$0xff]
        %v718 = vld [vmem:[%s170 + $0x22] sm:$0xff]
        %v719 = vld [vmem:[%s170 + $0x32] sm:$0xff]
        %v720 = vld [vmem:[%s170 + $0x3a] sm:$0xff]
        %v721 = vld [vmem:[%s170 + $0x4a] sm:$0xff]
        %v722 = vld [vmem:[%s170 + $0x52] sm:$0xff]
        %v723 = vld [vmem:[%s170 + $0x62] sm:$0xff]
        %v724 = vld [vmem:[%s170 + $0x6a] sm:$0xff]
        %v725 = vld [vmem:[%s170 + $0x7a] sm:$0xff]
        %v726 = vld [vmem:[%s170 + $0x82] sm:$0xff]
        %v727 = vld [vmem:[%s170 + $0x92] sm:$0xff]
        %v728 = vld [vmem:[%s170 + $0x9a] sm:$0xff]
        %v729 = vld [vmem:[%s170 + $0xaa] sm:$0xff]
        %v730 = vld [vmem:[%s170 + $0xb2] sm:$0xff]
        %v731 = vld [vmem:[%s170 + $0xc2] sm:$0xff]
        %v732 = vld [vmem:[%s170 + $0xca] sm:$0xff]
        %v733 = vld [vmem:[%s170 + $0xda] sm:$0xff]
        %v734 = vld [vmem:[%s170 + $0xe2] sm:$0xff]
        %v735 = vld [vmem:[%s170 + $0xf2] sm:$0xff]
        %v736 = vld [vmem:[%s170 + $0xfa] sm:$0xff]
        %v737 = vld [vmem:[%s170 + $0x10a] sm:$0xff]
        %v738 = vld [vmem:[%s170 + $0x112] sm:$0xff]
        %v739 = vld [vmem:[%s170 + $0x122] sm:$0xff]
        %v740 = vld [vmem:[%s170 + $0x12a] sm:$0xff]
        %v741 = vld [vmem:[%s170 + $0x13a] sm:$0xff]
        %v742 = vld [vmem:[%s170 + $0x142] sm:$0xff]
        %v743 = vld [vmem:[%s170 + $0x152] sm:$0xff]
        %v744 = vld [vmem:[%s170 + $0x15a] sm:$0xff]
        %v745 = vld [vmem:[%s170 + $0x16a] sm:$0xff]
        %v746 = vld [vmem:[%s170 + $0x172] sm:$0xff]
        %v747 = vld [vmem:[%s576 + $0x2] sm:$0x1]
        %v748 = vlaneseq
        %v749 = vshrl.u32 %v748, 7
        %v750 = vsub.s32 0, %v749
        %v751 = vrot.slane %v747, %v750
        %v752 = vmul.f32 %v715, %v751
        %v753 = vmul.f32 %v716, %v751
        %v754 = vmul.f32 %v717, %v751
        %v755 = vmul.f32 %v718, %v751
        %v756 = vmul.f32 %v719, %v751
        %v757 = vmul.f32 %v720, %v751
        %v758 = vmul.f32 %v721, %v751
        %v759 = vmul.f32 %v722, %v751
        %v760 = vmul.f32 %v723, %v751
        %v761 = vmul.f32 %v724, %v751
        %v762 = vmul.f32 %v725, %v751
        %v763 = vmul.f32 %v726, %v751
        %v764 = vmul.f32 %v727, %v751
        %v765 = vmul.f32 %v728, %v751
        %v766 = vmul.f32 %v729, %v751
        %v767 = vmul.f32 %v730, %v751
        %v768 = vmul.f32 %v731, %v751
        %v769 = vmul.f32 %v732, %v751
        %v770 = vmul.f32 %v733, %v751
        %v771 = vmul.f32 %v734, %v751
        %v772 = vmul.f32 %v735, %v751
        %v773 = vmul.f32 %v736, %v751
        %v774 = vmul.f32 %v737, %v751
        %v775 = vmul.f32 %v738, %v751
        %v776 = vmul.f32 %v739, %v751
        %v777 = vmul.f32 %v740, %v751
        %v778 = vmul.f32 %v741, %v751
        %v779 = vmul.f32 %v742, %v751
        %v780 = vmul.f32 %v743, %v751
        %v781 = vmul.f32 %v744, %v751
        %v782 = vmul.f32 %v745, %v751
        %v783 = vmul.f32 %v746, %v751
        %v784 = vadd.f32 %v683, %v752
        %v785 = vadd.f32 %v684, %v753
        %v786 = vadd.f32 %v685, %v754
        %v787 = vadd.f32 %v686, %v755
        %v788 = vadd.f32 %v687, %v756
        %v789 = vadd.f32 %v688, %v757
        %v790 = vadd.f32 %v689, %v758
        %v791 = vadd.f32 %v690, %v759
        %v792 = vadd.f32 %v691, %v760
        %v793 = vadd.f32 %v692, %v761
        %v794 = vadd.f32 %v693, %v762
        %v795 = vadd.f32 %v694, %v763
        %v796 = vadd.f32 %v695, %v764
        %v797 = vadd.f32 %v696, %v765
        %v798 = vadd.f32 %v697, %v766
        %v799 = vadd.f32 %v698, %v767
        %v800 = vadd.f32 %v699, %v768
        %v801 = vadd.f32 %v700, %v769
        %v802 = vadd.f32 %v701, %v770
        %v803 = vadd.f32 %v702, %v771
        %v804 = vadd.f32 %v703, %v772
        %v805 = vadd.f32 %v704, %v773
        %v806 = vadd.f32 %v705, %v774
        %v807 = vadd.f32 %v706, %v775
        %v808 = vadd.f32 %v707, %v776
        %v809 = vadd.f32 %v708, %v777
        %v810 = vadd.f32 %v709, %v778
        %v811 = vadd.f32 %v710, %v779
        %v812 = vadd.f32 %v711, %v780
        %v813 = vadd.f32 %v712, %v781
        %v814 = vadd.f32 %v713, %v782
        %v815 = vadd.f32 %v714, %v783
        %s816 = scalar_lea.vmem %s168, 48
        %v817 = vld [vmem:[%s816] sm:$0xff]
        %v818 = vld [vmem:[%s816 + $0x8] sm:$0xff]
        %v819 = vld [vmem:[%s816 + $0x18] sm:$0xff]
        %v820 = vld [vmem:[%s816 + $0x20] sm:$0xff]
        %v821 = vld [vmem:[%s816 + $0x30] sm:$0xff]
        %v822 = vld [vmem:[%s816 + $0x38] sm:$0xff]
        %v823 = vld [vmem:[%s816 + $0x48] sm:$0xff]
        %v824 = vld [vmem:[%s816 + $0x50] sm:$0xff]
        %v825 = vld [vmem:[%s816 + $0x60] sm:$0xff]
        %v826 = vld [vmem:[%s816 + $0x68] sm:$0xff]
        %v827 = vld [vmem:[%s816 + $0x78] sm:$0xff]
        %v828 = vld [vmem:[%s816 + $0x80] sm:$0xff]
        %v829 = vld [vmem:[%s816 + $0x90] sm:$0xff]
        %v830 = vld [vmem:[%s816 + $0x98] sm:$0xff]
        %v831 = vld [vmem:[%s816 + $0xa8] sm:$0xff]
        %v832 = vld [vmem:[%s816 + $0xb0] sm:$0xff]
        %v833 = vld [vmem:[%s816 + $0xc0] sm:$0xff]
        %v834 = vld [vmem:[%s816 + $0xc8] sm:$0xff]
        %v835 = vld [vmem:[%s816 + $0xd8] sm:$0xff]
        %v836 = vld [vmem:[%s816 + $0xe0] sm:$0xff]
        %v837 = vld [vmem:[%s816 + $0xf0] sm:$0xff]
        %v838 = vld [vmem:[%s816 + $0xf8] sm:$0xff]
        %v839 = vld [vmem:[%s816 + $0x108] sm:$0xff]
        %v840 = vld [vmem:[%s816 + $0x110] sm:$0xff]
        %v841 = vld [vmem:[%s816 + $0x120] sm:$0xff]
        %v842 = vld [vmem:[%s816 + $0x128] sm:$0xff]
        %v843 = vld [vmem:[%s816 + $0x138] sm:$0xff]
        %v844 = vld [vmem:[%s816 + $0x140] sm:$0xff]
        %v845 = vld [vmem:[%s816 + $0x150] sm:$0xff]
        %v846 = vld [vmem:[%s816 + $0x158] sm:$0xff]
        %v847 = vld [vmem:[%s816 + $0x168] sm:$0xff]
        %v848 = vld [vmem:[%s816 + $0x170] sm:$0xff]
        %s849 = scalar_lea.vmem %s1, 8
        %v850 = vld [vmem:[%s849] sm:$0x1]
        %v851 = vlaneseq
        %v852 = vshrl.u32 %v851, 7
        %v853 = vsub.s32 0, %v852
        %v854 = vrot.slane %v850, %v853
        %v855 = vmul.f32 %v817, %v854
        %v856 = vmul.f32 %v818, %v854
        %v857 = vmul.f32 %v819, %v854
        %v858 = vmul.f32 %v820, %v854
        %v859 = vmul.f32 %v821, %v854
        %v860 = vmul.f32 %v822, %v854
        %v861 = vmul.f32 %v823, %v854
        %v862 = vmul.f32 %v824, %v854
        %v863 = vmul.f32 %v825, %v854
        %v864 = vmul.f32 %v826, %v854
        %v865 = vmul.f32 %v827, %v854
        %v866 = vmul.f32 %v828, %v854
        %v867 = vmul.f32 %v829, %v854
        %v868 = vmul.f32 %v830, %v854
        %v869 = vmul.f32 %v831, %v854
        %v870 = vmul.f32 %v832, %v854
        %v871 = vmul.f32 %v833, %v854
        %v872 = vmul.f32 %v834, %v854
        %v873 = vmul.f32 %v835, %v854
        %v874 = vmul.f32 %v836, %v854
        %v875 = vmul.f32 %v837, %v854
        %v876 = vmul.f32 %v838, %v854
        %v877 = vmul.f32 %v839, %v854
        %v878 = vmul.f32 %v840, %v854
        %v879 = vmul.f32 %v841, %v854
        %v880 = vmul.f32 %v842, %v854
        %v881 = vmul.f32 %v843, %v854
        %v882 = vmul.f32 %v844, %v854
        %v883 = vmul.f32 %v845, %v854
        %v884 = vmul.f32 %v846, %v854
        %v885 = vmul.f32 %v847, %v854
        %v886 = vmul.f32 %v848, %v854
        %v887 = vadd.f32 %v784, %v855
        %v888 = vadd.f32 %v785, %v856
        %v889 = vadd.f32 %v786, %v857
        %v890 = vadd.f32 %v787, %v858
        %v891 = vadd.f32 %v788, %v859
        %v892 = vadd.f32 %v789, %v860
        %v893 = vadd.f32 %v790, %v861
        %v894 = vadd.f32 %v791, %v862
        %v895 = vadd.f32 %v792, %v863
        %v896 = vadd.f32 %v793, %v864
        %v897 = vadd.f32 %v794, %v865
        %v898 = vadd.f32 %v795, %v866
        %v899 = vadd.f32 %v796, %v867
        %v900 = vadd.f32 %v797, %v868
        %v901 = vadd.f32 %v798, %v869
        %v902 = vadd.f32 %v799, %v870
        %v903 = vadd.f32 %v800, %v871
        %v904 = vadd.f32 %v801, %v872
        %v905 = vadd.f32 %v802, %v873
        %v906 = vadd.f32 %v803, %v874
        %v907 = vadd.f32 %v804, %v875
        %v908 = vadd.f32 %v805, %v876
        %v909 = vadd.f32 %v806, %v877
        %v910 = vadd.f32 %v807, %v878
        %v911 = vadd.f32 %v808, %v879
        %v912 = vadd.f32 %v809, %v880
        %v913 = vadd.f32 %v810, %v881
        %v914 = vadd.f32 %v811, %v882
        %v915 = vadd.f32 %v812, %v883
        %v916 = vadd.f32 %v813, %v884
        %v917 = vadd.f32 %v814, %v885
        %v918 = vadd.f32 %v815, %v886
        %v919 = vld [vmem:[%s816 + $0x1] sm:$0xff]
        %v920 = vld [vmem:[%s816 + $0x9] sm:$0xff]
        %v921 = vld [vmem:[%s816 + $0x19] sm:$0xff]
        %v922 = vld [vmem:[%s816 + $0x21] sm:$0xff]
        %v923 = vld [vmem:[%s816 + $0x31] sm:$0xff]
        %v924 = vld [vmem:[%s816 + $0x39] sm:$0xff]
        %v925 = vld [vmem:[%s816 + $0x49] sm:$0xff]
        %v926 = vld [vmem:[%s816 + $0x51] sm:$0xff]
        %v927 = vld [vmem:[%s816 + $0x61] sm:$0xff]
        %v928 = vld [vmem:[%s816 + $0x69] sm:$0xff]
        %v929 = vld [vmem:[%s816 + $0x79] sm:$0xff]
        %v930 = vld [vmem:[%s816 + $0x81] sm:$0xff]
        %v931 = vld [vmem:[%s816 + $0x91] sm:$0xff]
        %v932 = vld [vmem:[%s816 + $0x99] sm:$0xff]
        %v933 = vld [vmem:[%s816 + $0xa9] sm:$0xff]
        %v934 = vld [vmem:[%s816 + $0xb1] sm:$0xff]
        %v935 = vld [vmem:[%s816 + $0xc1] sm:$0xff]
        %v936 = vld [vmem:[%s816 + $0xc9] sm:$0xff]
        %v937 = vld [vmem:[%s816 + $0xd9] sm:$0xff]
        %v938 = vld [vmem:[%s816 + $0xe1] sm:$0xff]
        %v939 = vld [vmem:[%s816 + $0xf1] sm:$0xff]
        %v940 = vld [vmem:[%s816 + $0xf9] sm:$0xff]
        %v941 = vld [vmem:[%s816 + $0x109] sm:$0xff]
        %v942 = vld [vmem:[%s816 + $0x111] sm:$0xff]
        %v943 = vld [vmem:[%s816 + $0x121] sm:$0xff]
        %v944 = vld [vmem:[%s816 + $0x129] sm:$0xff]
        %v945 = vld [vmem:[%s816 + $0x139] sm:$0xff]
        %v946 = vld [vmem:[%s816 + $0x141] sm:$0xff]
        %v947 = vld [vmem:[%s816 + $0x151] sm:$0xff]
        %v948 = vld [vmem:[%s816 + $0x159] sm:$0xff]
        %v949 = vld [vmem:[%s816 + $0x169] sm:$0xff]
        %v950 = vld [vmem:[%s816 + $0x171] sm:$0xff]
        %v951 = vld [vmem:[%s849 + $0x1] sm:$0x1]
        %v952 = vlaneseq
        %v953 = vshrl.u32 %v952, 7
        %v954 = vsub.s32 0, %v953
        %v955 = vrot.slane %v951, %v954
        %v956 = vmul.f32 %v919, %v955
        %v957 = vmul.f32 %v920, %v955
        %v958 = vmul.f32 %v921, %v955
        %v959 = vmul.f32 %v922, %v955
        %v960 = vmul.f32 %v923, %v955
        %v961 = vmul.f32 %v924, %v955
        %v962 = vmul.f32 %v925, %v955
        %v963 = vmul.f32 %v926, %v955
        %v964 = vmul.f32 %v927, %v955
        %v965 = vmul.f32 %v928, %v955
        %v966 = vmul.f32 %v929, %v955
        %v967 = vmul.f32 %v930, %v955
        %v968 = vmul.f32 %v931, %v955
        %v969 = vmul.f32 %v932, %v955
        %v970 = vmul.f32 %v933, %v955
        %v971 = vmul.f32 %v934, %v955
        %v972 = vmul.f32 %v935, %v955
        %v973 = vmul.f32 %v936, %v955
        %v974 = vmul.f32 %v937, %v955
        %v975 = vmul.f32 %v938, %v955
        %v976 = vmul.f32 %v939, %v955
        %v977 = vmul.f32 %v940, %v955
        %v978 = vmul.f32 %v941, %v955
        %v979 = vmul.f32 %v942, %v955
        %v980 = vmul.f32 %v943, %v955
        %v981 = vmul.f32 %v944, %v955
        %v982 = vmul.f32 %v945, %v955
        %v983 = vmul.f32 %v946, %v955
        %v984 = vmul.f32 %v947, %v955
        %v985 = vmul.f32 %v948, %v955
        %v986 = vmul.f32 %v949, %v955
        %v987 = vmul.f32 %v950, %v955
        %v988 = vadd.f32 %v887, %v956
        %v989 = vadd.f32 %v888, %v957
        %v990 = vadd.f32 %v889, %v958
        %v991 = vadd.f32 %v890, %v959
        %v992 = vadd.f32 %v891, %v960
        %v993 = vadd.f32 %v892, %v961
        %v994 = vadd.f32 %v893, %v962
        %v995 = vadd.f32 %v894, %v963
        %v996 = vadd.f32 %v895, %v964
        %v997 = vadd.f32 %v896, %v965
        %v998 = vadd.f32 %v897, %v966
        %v999 = vadd.f32 %v898, %v967
        %v1000 = vadd.f32 %v899, %v968
        %v1001 = vadd.f32 %v900, %v969
        %v1002 = vadd.f32 %v901, %v970
        %v1003 = vadd.f32 %v902, %v971
        %v1004 = vadd.f32 %v903, %v972
        %v1005 = vadd.f32 %v904, %v973
        %v1006 = vadd.f32 %v905, %v974
        %v1007 = vadd.f32 %v906, %v975
        %v1008 = vadd.f32 %v907, %v976
        %v1009 = vadd.f32 %v908, %v977
        %v1010 = vadd.f32 %v909, %v978
        %v1011 = vadd.f32 %v910, %v979
        %v1012 = vadd.f32 %v911, %v980
        %v1013 = vadd.f32 %v912, %v981
        %v1014 = vadd.f32 %v913, %v982
        %v1015 = vadd.f32 %v914, %v983
        %v1016 = vadd.f32 %v915, %v984
        %v1017 = vadd.f32 %v916, %v985
        %v1018 = vadd.f32 %v917, %v986
        %v1019 = vadd.f32 %v918, %v987
        %v1020 = vld [vmem:[%s816 + $0x2] sm:$0xff]
        %v1021 = vld [vmem:[%s816 + $0xa] sm:$0xff]
        %v1022 = vld [vmem:[%s816 + $0x1a] sm:$0xff]
        %v1023 = vld [vmem:[%s816 + $0x22] sm:$0xff]
        %v1024 = vld [vmem:[%s816 + $0x32] sm:$0xff]
        %v1025 = vld [vmem:[%s816 + $0x3a] sm:$0xff]
        %v1026 = vld [vmem:[%s816 + $0x4a] sm:$0xff]
        %v1027 = vld [vmem:[%s816 + $0x52] sm:$0xff]
        %v1028 = vld [vmem:[%s816 + $0x62] sm:$0xff]
        %v1029 = vld [vmem:[%s816 + $0x6a] sm:$0xff]
        %v1030 = vld [vmem:[%s816 + $0x7a] sm:$0xff]
        %v1031 = vld [vmem:[%s816 + $0x82] sm:$0xff]
        %v1032 = vld [vmem:[%s816 + $0x92] sm:$0xff]
        %v1033 = vld [vmem:[%s816 + $0x9a] sm:$0xff]
        %v1034 = vld [vmem:[%s816 + $0xaa] sm:$0xff]
        %v1035 = vld [vmem:[%s816 + $0xb2] sm:$0xff]
        %v1036 = vld [vmem:[%s816 + $0xc2] sm:$0xff]
        %v1037 = vld [vmem:[%s816 + $0xca] sm:$0xff]
        %v1038 = vld [vmem:[%s816 + $0xda] sm:$0xff]
        %v1039 = vld [vmem:[%s816 + $0xe2] sm:$0xff]
        %v1040 = vld [vmem:[%s816 + $0xf2] sm:$0xff]
        %v1041 = vld [vmem:[%s816 + $0xfa] sm:$0xff]
        %v1042 = vld [vmem:[%s816 + $0x10a] sm:$0xff]
        %v1043 = vld [vmem:[%s816 + $0x112] sm:$0xff]
        %v1044 = vld [vmem:[%s816 + $0x122] sm:$0xff]
        %v1045 = vld [vmem:[%s816 + $0x12a] sm:$0xff]
        %v1046 = vld [vmem:[%s816 + $0x13a] sm:$0xff]
        %v1047 = vld [vmem:[%s816 + $0x142] sm:$0xff]
        %v1048 = vld [vmem:[%s816 + $0x152] sm:$0xff]
        %v1049 = vld [vmem:[%s816 + $0x15a] sm:$0xff]
        %v1050 = vld [vmem:[%s816 + $0x16a] sm:$0xff]
        %v1051 = vld [vmem:[%s816 + $0x172] sm:$0xff]
        %v1052 = vld [vmem:[%s849 + $0x2] sm:$0x1]
        %v1053 = vlaneseq
        %v1054 = vshrl.u32 %v1053, 7
        %v1055 = vsub.s32 0, %v1054
        %v1056 = vrot.slane %v1052, %v1055
        %v1057 = vmul.f32 %v1020, %v1056
        %v1058 = vmul.f32 %v1021, %v1056
        %v1059 = vmul.f32 %v1022, %v1056
        %v1060 = vmul.f32 %v1023, %v1056
        %v1061 = vmul.f32 %v1024, %v1056
        %v1062 = vmul.f32 %v1025, %v1056
        %v1063 = vmul.f32 %v1026, %v1056
        %v1064 = vmul.f32 %v1027, %v1056
        %v1065 = vmul.f32 %v1028, %v1056
        %v1066 = vmul.f32 %v1029, %v1056
        %v1067 = vmul.f32 %v1030, %v1056
        %v1068 = vmul.f32 %v1031, %v1056
        %v1069 = vmul.f32 %v1032, %v1056
        %v1070 = vmul.f32 %v1033, %v1056
        %v1071 = vmul.f32 %v1034, %v1056
        %v1072 = vmul.f32 %v1035, %v1056
        %v1073 = vmul.f32 %v1036, %v1056
        %v1074 = vmul.f32 %v1037, %v1056
        %v1075 = vmul.f32 %v1038, %v1056
        %v1076 = vmul.f32 %v1039, %v1056
        %v1077 = vmul.f32 %v1040, %v1056
        %v1078 = vmul.f32 %v1041, %v1056
        %v1079 = vmul.f32 %v1042, %v1056
        %v1080 = vmul.f32 %v1043, %v1056
        %v1081 = vmul.f32 %v1044, %v1056
        %v1082 = vmul.f32 %v1045, %v1056
        %v1083 = vmul.f32 %v1046, %v1056
        %v1084 = vmul.f32 %v1047, %v1056
        %v1085 = vmul.f32 %v1048, %v1056
        %v1086 = vmul.f32 %v1049, %v1056
        %v1087 = vmul.f32 %v1050, %v1056
        %v1088 = vmul.f32 %v1051, %v1056
        %v1089 = vadd.f32 %v988, %v1057
        %v1090 = vadd.f32 %v989, %v1058
        %v1091 = vadd.f32 %v990, %v1059
        %v1092 = vadd.f32 %v991, %v1060
        %v1093 = vadd.f32 %v992, %v1061
        %v1094 = vadd.f32 %v993, %v1062
        %v1095 = vadd.f32 %v994, %v1063
        %v1096 = vadd.f32 %v995, %v1064
        %v1097 = vadd.f32 %v996, %v1065
        %v1098 = vadd.f32 %v997, %v1066
        %v1099 = vadd.f32 %v998, %v1067
        %v1100 = vadd.f32 %v999, %v1068
        %v1101 = vadd.f32 %v1000, %v1069
        %v1102 = vadd.f32 %v1001, %v1070
        %v1103 = vadd.f32 %v1002, %v1071
        %v1104 = vadd.f32 %v1003, %v1072
        %v1105 = vadd.f32 %v1004, %v1073
        %v1106 = vadd.f32 %v1005, %v1074
        %v1107 = vadd.f32 %v1006, %v1075
        %v1108 = vadd.f32 %v1007, %v1076
        %v1109 = vadd.f32 %v1008, %v1077
        %v1110 = vadd.f32 %v1009, %v1078
        %v1111 = vadd.f32 %v1010, %v1079
        %v1112 = vadd.f32 %v1011, %v1080
        %v1113 = vadd.f32 %v1012, %v1081
        %v1114 = vadd.f32 %v1013, %v1082
        %v1115 = vadd.f32 %v1014, %v1083
        %v1116 = vadd.f32 %v1015, %v1084
        %v1117 = vadd.f32 %v1016, %v1085
        %v1118 = vadd.f32 %v1017, %v1086
        %v1119 = vadd.f32 %v1018, %v1087
        %v1120 = vadd.f32 %v1019, %v1088
        %vm1121 = vcmask 523264
        %1122 = vst.msk [vmem:[%s163] sm:$0xff] %vm1121, %v1089
        %1123 = vst.msk [vmem:[%s163 + $0x8] sm:$0xff] %vm1121, %v1090
        %1124 = vst.msk [vmem:[%s163 + $0x10] sm:$0xff] %vm1121, %v1091
        %1125 = vst.msk [vmem:[%s163 + $0x18] sm:$0xff] %vm1121, %v1092
        %1126 = vst.msk [vmem:[%s163 + $0x20] sm:$0xff] %vm1121, %v1093
        %1127 = vst.msk [vmem:[%s163 + $0x28] sm:$0xff] %vm1121, %v1094
        %1128 = vst.msk [vmem:[%s163 + $0x30] sm:$0xff] %vm1121, %v1095
        %1129 = vst.msk [vmem:[%s163 + $0x38] sm:$0xff] %vm1121, %v1096
        %1130 = vst.msk [vmem:[%s163 + $0x40] sm:$0xff] %vm1121, %v1097
        %1131 = vst.msk [vmem:[%s163 + $0x48] sm:$0xff] %vm1121, %v1098
        %1132 = vst.msk [vmem:[%s163 + $0x50] sm:$0xff] %vm1121, %v1099
        %1133 = vst.msk [vmem:[%s163 + $0x58] sm:$0xff] %vm1121, %v1100
        %1134 = vst.msk [vmem:[%s163 + $0x60] sm:$0xff] %vm1121, %v1101
        %1135 = vst.msk [vmem:[%s163 + $0x68] sm:$0xff] %vm1121, %v1102
        %1136 = vst.msk [vmem:[%s163 + $0x70] sm:$0xff] %vm1121, %v1103
        %1137 = vst.msk [vmem:[%s163 + $0x78] sm:$0xff] %vm1121, %v1104
        %1138 = vst.msk [vmem:[%s163 + $0x80] sm:$0xff] %vm1121, %v1105
        %1139 = vst.msk [vmem:[%s163 + $0x88] sm:$0xff] %vm1121, %v1106
        %1140 = vst.msk [vmem:[%s163 + $0x90] sm:$0xff] %vm1121, %v1107
        %1141 = vst.msk [vmem:[%s163 + $0x98] sm:$0xff] %vm1121, %v1108
        %1142 = vst.msk [vmem:[%s163 + $0xa0] sm:$0xff] %vm1121, %v1109
        %1143 = vst.msk [vmem:[%s163 + $0xa8] sm:$0xff] %vm1121, %v1110
        %1144 = vst.msk [vmem:[%s163 + $0xb0] sm:$0xff] %vm1121, %v1111
        %1145 = vst.msk [vmem:[%s163 + $0xb8] sm:$0xff] %vm1121, %v1112
        %1146 = vst.msk [vmem:[%s163 + $0xc0] sm:$0xff] %vm1121, %v1113
        %1147 = vst.msk [vmem:[%s163 + $0xc8] sm:$0xff] %vm1121, %v1114
        %1148 = vst.msk [vmem:[%s163 + $0xd0] sm:$0xff] %vm1121, %v1115
        %1149 = vst.msk [vmem:[%s163 + $0xd8] sm:$0xff] %vm1121, %v1116
        %1150 = vst.msk [vmem:[%s163 + $0xe0] sm:$0xff] %vm1121, %v1117
        %1151 = vst.msk [vmem:[%s163 + $0xe8] sm:$0xff] %vm1121, %v1118
        %1152 = vst.msk [vmem:[%s163 + $0xf0] sm:$0xff] %vm1121, %v1119
        %1153 = vst.msk [vmem:[%s163 + $0xf8] sm:$0xff] %vm1121, %v1120
        %s1154 = sand.u32 %s93, 1
        %s1155 = scalar_lea.sflag [#allocation3], %s1154
        %s1156 = sand.u32 %s93, 1
        %s1157 = smul.addr %s1156, 256
        %s1158 = scalar_lea.vmem [#allocation2], %s1157
        // Predicated region
        $region33: #{tpu_custom_call.1} parent=31 // pred_check
          %p1159 = pneg %p103
        $region34: #{tpu_custom_call.1} parent=31 // pred_check_branch
          %1161 = sbr.rel (%p1159) target = $region36
        $region35: #{tpu_custom_call.1} parent=31 // pred_region
          %s1163 = ssub.s32 4096, 4096
          %1164 = vsyncadd %s1155, %s1163
          %s1165 = smul.addr %s17, 32
          %s1166 = smul.addr %s1165, 128
          %s1167 = scalar_lea.hbm %s3, %s1166
          %s1168 = sshll.u32 %s1158, 4
          %s1169 = int_to_ptr.vmem [resolvable:$true] %s1168
          %1174 = dma.vmem_to_hbm [thread:$0]  %s1169, 4096, %s1167, %s1155, 128, 128, 8
        $region36: #{tpu_custom_call.1} parent=31 // pred_fallthru
          _
      $region32: #{tpu_custom_call.1} parent=5 // pred_fallthru
        _
      %p1175 = scmp.le.s32.totalorder 2, %s12
      // Predicated region
      $region37: #{tpu_custom_call.1} parent=5 // pred_check
        %p1176 = pneg %p1175
      $region38: #{tpu_custom_call.1} parent=5 // pred_check_branch
        %1178 = sbr.rel (%p1176) target = $region40
      $region39: #{tpu_custom_call.1} parent=5 // pred_region
        %s1179 = ssub.s32 %s12, 2
        // Predicated region
        $region41: #{tpu_custom_call.1} parent=39 // pred_check
          %p1180 = pneg %p109
        $region42: #{tpu_custom_call.1} parent=39 // pred_check_branch
          %1182 = sbr.rel (%p1180) target = $region44
        $region43: #{tpu_custom_call.1} parent=39 // pred_region
          %s1183 = sand.u32 %s94, 1
          %s1184 = scalar_lea.sflag [#allocation3], %s1183
          %s1185 = sand.u32 %s94, 1
          %s1186 = smul.addr %s1185, 256
          %s1187 = scalar_lea.vmem [#allocation2], %s1186
          %1188 = dma.done %s1184, 4096
        $region44: #{tpu_custom_call.1} parent=39 // pred_fallthru
          _
      $region40: #{tpu_custom_call.1} parent=5 // pred_fallthru
        _
    $region6: #{tpu_custom_call.1} parent=1 // loop_footer
      %s16 = sadd.s32 1, %s12
    $region7: #{tpu_custom_call.1} parent=1 // loop_footer_branch
      %11 = sbr.rel target = $region3
    $region8: #{tpu_custom_call.1} parent=1 // loop_exit
      _
    %1189 = vsyncpa [#allocation3], 1
    %s1190 = scalar_lea.sflag [#allocation3], 1
    %1191 = vsyncpa %s1190, 1

</llo_original>
